<compile_context>
chip_gen: v7x
topology: tpu7x:2x2x1
jax: 0.10.0
libtpu: 0.0.40
codegen_flags: <defaults>
</compile_context>

<pallas_src>
import math

import numpy as np
import jax
import jax.numpy as jnp
from jax.experimental import pallas as pl
from jax.experimental.pallas import tpu as pltpu

BRANCHES = 2
POOL_TYPES = (("avg", "max"), ("lp", "lse"))
BN_EPS = 1e-5
KS = 7  # CBAM SpatialGate kernel size


# --------------------------------------------------------------------------------------
# Host-side helpers: dense linear operator for the 7x7 SpatialGate conv + weight packing.
# --------------------------------------------------------------------------------------
def build_spatial_operator(w_eff, H, W):
    """Return op (2*H*W, H*W) such that conv_out.flatten() == [cmax | cmean] @ op.

    w_eff: (2, KS, KS) conv weights with eval-mode BatchNorm already folded in.
    Zero padding of 3 on each side (PyTorch Conv2d(2, 1, 7, padding=3)).
    """
    HW = H * W
    pad = (KS - 1) // 2
    op = np.zeros((2 * HW, HW), np.float32)
    ys, xs = np.arange(H), np.arange(W)
    for c in range(2):
        for dy in range(KS):
            yv = ys[(ys + dy - pad >= 0) & (ys + dy - pad < H)]
            for dx in range(KS):
                xv = xs[(xs + dx - pad >= 0) & (xs + dx - pad < W)]
                if yv.size == 0 or xv.size == 0:
                    continue
                Y, X = np.meshgrid(yv, xv, indexing="ij")
                rows = c * HW + (Y + dy - pad) * W + (X + dx - pad)
                cols = Y * W + X
                op[rows.reshape(-1), cols.reshape(-1)] = float(w_eff[c, dy, dx])
    return op


def _round_up(n, m):
    return -(-n // m) * m


def _block_diag(a, b):
    a = np.asarray(a, np.float32)
    b = np.asarray(b, np.float32)
    out = np.zeros((a.shape[0] + b.shape[0], a.shape[1] + b.shape[1]), np.float32)
    out[: a.shape[0], : a.shape[1]] = a
    out[a.shape[0]:, a.shape[1]:] = b
    return out


def _pack_f32_slab(entries):
    """Pack 2-D f32 arrays row-wise into one (rows, 128) slab at 8-row-aligned offsets."""
    lane = 128
    blocks, offs, row = [], {}, 0
    for name, a in entries:
        a = np.asarray(a, np.float32)
        assert a.ndim == 2 and a.shape[1] <= lane, (name, a.shape)
        rpad = _round_up(a.shape[0], 8)
        blk = np.zeros((rpad, lane), np.float32)
        blk[: a.shape[0], : a.shape[1]] = a
        blocks.append(blk)
        offs[name] = row
        row += rpad
    return np.concatenate(blocks, axis=0), offs


def _pick_batch_tile(B, max_bt=8):
    """Largest divisor of B (<= max_bt) that still leaves >= 2 'parallel' grid steps."""
    bt = 1
    for cand in range(1, min(B, max_bt) + 1):
        if B % cand == 0:
            bt = cand
    while bt > 1 and B // bt < 2:           # keep both v7x TensorCores fed when B >= 2
        bt -= 1
        while B % bt:
            bt -= 1
    return max(bt, 1)


# --------------------------------------------------------------------------------------
# Fully fused kernel: 1x1 convs + ChannelGates + SpatialGates + fusion + output conv.
# --------------------------------------------------------------------------------------
def make_fused_kernel(F, Fr, Cin, Cout, HW, Bt, offs):
    F2 = 2 * F
    Fr2 = 2 * Fr

    def kernel(x_ref, sop_ref, wb_ref, out_ref):
        x = x_ref[...]                                    # (Cin, Bt*HW) f32, lane-dense
        x_bf = x.astype(jnp.bfloat16)

        # Static slices out of the packed f32 weight slab (8-row-aligned offsets).
        wc = wb_ref[offs["wc"]:offs["wc"] + F2, 0:Cin]                  # (2F, Cin)
        wout = wb_ref[offs["wout"]:offs["wout"] + Cout, 0:F2 + Cin]     # (Cout, 2F+Cin)
        w1 = wb_ref[offs["w1"]:offs["w1"] + Fr2, 0:F2]                  # block-diag (2Fr, 2F)
        w2 = wb_ref[offs["w2"]:offs["w2"] + F2, 0:Fr2]                  # block-diag (2F, 2Fr)
        bc = wb_ref[offs["bc"]:offs["bc"] + F2, 0:1]
        b1 = wb_ref[offs["b1"]:offs["b1"] + Fr2, 0:1]
        b2 = wb_ref[offs["b2"]:offs["b2"] + F2, 0:1]
        bo = wb_ref[offs["bout"]:offs["bout"] + Cout, 0:1]

        # Both branches' 1x1 convs for all Bt images: one MXU push (2F,Cin)@(Cin,Bt*HW).
        feat = jnp.dot(wc.astype(jnp.bfloat16), x_bf,
                       preferred_element_type=jnp.float32) + bc          # (2F, Bt*HW) f32

        # Per-batch channel pooling (branch0: avg/max, branch1: lp/lse), f32 math.
        poolA, poolB = [], []                 # pool-type 0 / 1 columns, each (2F, 1)
        for b in range(Bt):
            s0 = feat[:F, b * HW:(b + 1) * HW]                           # (F, HW)
            s1 = feat[F:, b * HW:(b + 1) * HW]
            p_avg = jnp.mean(s0, axis=1, keepdims=True)
            p_max = jnp.max(s0, axis=1, keepdims=True)
            p_lp = jnp.sqrt(jnp.sum(s1 * s1, axis=1, keepdims=True))     # lp_pool, p=2
            mx = jnp.max(s1, axis=1, keepdims=True)
            p_lse = mx + jnp.log(jnp.sum(jnp.exp(s1 - mx), axis=1, keepdims=True))
            poolA.append(jnp.concatenate([p_avg, p_lp], axis=0))         # (2F, 1)
            poolB.append(jnp.concatenate([p_max, p_lse], axis=0))

        # pools (2F, 2*Bt): columns [type-A for batch 0..Bt-1 | type-B for batch 0..Bt-1]
        col = jax.lax.broadcasted_iota(jnp.int32, (F2, 2 * Bt), 1)
        pools = jnp.zeros((F2, 2 * Bt), jnp.float32)
        for b in range(Bt):
            pools = jnp.where(col == b, poolA[b], pools)
            pools = jnp.where(col == Bt + b, poolB[b], pools)

        # Both ChannelGate MLPs as block-diagonal matmuls over all batches & pool types.
        h = jnp.maximum(jnp.dot(w1, pools, preferred_element_type=jnp.float32) + b1, 0.0)
        att = jnp.dot(w2, h, preferred_element_type=jnp.float32) + b2    # (2F, 2*Bt)
        cs = jax.nn.sigmoid(att[:, 0:Bt] + att[:, Bt:2 * Bt])            # (2F, Bt)

        # Channel-gate the features; build both SpatialGate pooled maps for every batch.
        xca0, xca1, pm_rows = [], [], []
        for b in range(Bt):
            f0 = feat[:F, b * HW:(b + 1) * HW]
            f1 = feat[F:, b * HW:(b + 1) * HW]
            a0 = f0 * cs[0:F, b:b + 1]
            a1 = f1 * cs[F:F2, b:b + 1]
            xca0.append(a0)
            xca1.append(a1)
            pm_rows.append(jnp.concatenate(
                [jnp.max(a0, axis=0, keepdims=True), jnp.mean(a0, axis=0, keepdims=True),
                 jnp.max(a1, axis=0, keepdims=True), jnp.mean(a1, axis=0, keepdims=True)],
                axis=1))                                                  # (1, 4*HW)

        rowi = jax.lax.broadcasted_iota(jnp.int32, (Bt, 4 * HW), 0)
        pm = jnp.zeros((Bt, 4 * HW), jnp.float32)
        for b in range(Bt):
            pm = jnp.where(rowi == b, pm_rows[b], pm)                     # (Bt, 4*HW)

        # Both branches' 7x7 SpatialGate convs for all batches: ONE MXU matmul against
        # the block-diagonal dense operator (M=Bt, K=4*HW, N=2*HW), then sigmoid (f32).
        sg = jax.nn.sigmoid(jnp.dot(pm.astype(jnp.bfloat16), sop_ref[...],
                                    preferred_element_type=jnp.float32))  # (Bt, 2*HW)

        # Spatial gate + residual, branch fusion z=[a*b ; a+b ; x], final 1x1 conv.
        z_segs = []
        for b in range(Bt):
            f0 = feat[:F, b * HW:(b + 1) * HW]
            f1 = feat[F:, b * HW:(b + 1) * HW]
            oa = xca0[b] * sg[b:b + 1, 0:HW] + f0                         # (F, HW)
            ob = xca1[b] * sg[b:b + 1, HW:2 * HW] + f1
            z_segs.append(jnp.concatenate(
                [oa * ob, oa + ob, x[:, b * HW:(b + 1) * HW]], axis=0))   # (2F+Cin, HW)
        z = z_segs[0] if Bt == 1 else jnp.concatenate(z_segs, axis=1)     # (2F+Cin, Bt*HW)

        out_ref[...] = (jnp.dot(wout.astype(jnp.bfloat16), z.astype(jnp.bfloat16),
                                preferred_element_type=jnp.float32) + bo)  # (Cout, Bt*HW)

    return kernel


# --------------------------------------------------------------------------------------
# Wrapper (NCHW in / NCHW out, matching the PyTorch module).
# --------------------------------------------------------------------------------------
def divergent_attention_forward(x_nchw, params, max_batch_tile=8):
    B, Cin, H, W = x_nchw.shape
    HW = H * W
    F = params["wc"].shape[1]
    Fr = params["w1"].shape[1]
    Cout = params["wout"].shape[0]
    F2 = 2 * F

    assert HW % 128 == 0, "H*W must be a multiple of 128 (lane-dense blocks / segments)"
    assert F % 8 == 0, "conv_filters must be a multiple of 8 (copy-free sublane slices)"

    Bt = _pick_batch_tile(B, max_batch_tile)
    nsteps = B // Bt

    # Channel-major, batch-folded-into-lanes layout: (Cin, B*HW), per-batch HW segments.
    x_lanes = jnp.transpose(x_nchw.reshape(B, Cin, HW), (1, 0, 2)).reshape(Cin, B * HW)

    # One-time host-side weight packing (not per-step work).
    wc_cat = np.concatenate([np.asarray(params["wc"][i]) for i in range(BRANCHES)], axis=0)
    bc_col = np.concatenate([np.asarray(params["bc"][i]) for i in range(BRANCHES)])[:, None]
    w1_bd = _block_diag(params["w1"][0], params["w1"][1])                 # (2Fr, 2F)
    b1_col = np.concatenate([np.asarray(params["b1"][i]) for i in range(BRANCHES)])[:, None]
    w2_bd = _block_diag(params["w2"][0], params["w2"][1])                 # (2F, 2Fr)
    b2_col = np.concatenate([np.asarray(params["b2"][i]) for i in range(BRANCHES)])[:, None]
    wout = np.asarray(params["wout"])                                     # (Cout, 2F+Cin)
    bout_col = np.asarray(params["bout"])[:, None]

    wb_slab_np, offs = _pack_f32_slab([
        ("wc", wc_cat), ("wout", wout), ("w1", w1_bd), ("w2", w2_bd),
        ("bc", bc_col), ("b1", b1_col), ("b2", b2_col), ("bout", bout_col)])
    wb_slab = jnp.asarray(wb_slab_np)                                     # (rows, 128) f32

    bn_scale = 1.0 / math.sqrt(1.0 + BN_EPS)
    ws_np = np.asarray(params["ws"]) * bn_scale                           # (2, 1, 2, KS, KS)
    sop_bd_np = _block_diag(build_spatial_operator(ws_np[0, 0], H, W),
                            build_spatial_operator(ws_np[1, 0], H, W))    # (4HW, 2HW)
    sop_bd = jnp.asarray(sop_bd_np, dtype=jnp.bfloat16)                   # bf16 in HBM

    flops = int(2 * B * HW * (F2 * Cin + Cout * (F2 + Cin))               # in/out 1x1 convs
                + 2 * B * (4 * HW) * (2 * HW)                             # spatial operator
                + 2 * (2 * B) * (Fr2_ := 2 * Fr) * F2 * 2)                # channel MLPs
    transcendentals = int(B * (F * HW + 2 * HW + 2 * F2))                 # lse exp + sigmoids
    bytes_accessed = int(x_lanes.size * 4 + B * Cout * HW * 4
                         + sop_bd.size * 2 + wb_slab.size * 4)

    out = pl.pallas_call(
        make_fused_kernel(F, Fr, Cin, Cout, HW, Bt, offs),
        grid=(nsteps,),
        in_specs=[
            pl.BlockSpec((Cin, Bt * HW), lambda i: (0, i)),
            pl.BlockSpec(sop_bd.shape, lambda i: (0, 0)),
            pl.BlockSpec(wb_slab.shape, lambda i: (0, 0)),
        ],
        out_specs=pl.BlockSpec((Cout, Bt * HW), lambda i: (0, i)),
        out_shape=jax.ShapeDtypeStruct((Cout, B * HW), jnp.float32),
        compiler_params=pltpu.CompilerParams(dimension_semantics=("parallel",)),
        cost_estimate=pl.CostEstimate(flops=flops, transcendentals=transcendentals,
                                      bytes_accessed=bytes_accessed),
    )(x_lanes, sop_bd, wb_slab)

    # (Cout, B*HW) -> NCHW (out_activation is Identity).
    return jnp.transpose(out.reshape(Cout, B, HW), (1, 0, 2)).reshape(B, Cout, H, W)


# --------------------------------------------------------------------------------------
# Pure-JAX reference (for correctness check)
# --------------------------------------------------------------------------------------
def reference_forward(x, params):
    bn_scale = 1.0 / math.sqrt(1.0 + BN_EPS)

    def conv1x1(inp, w, b):
        return jnp.einsum("oi,bihw->bohw", w, inp) + b[None, :, None, None]

    feats = [conv1x1(x, params["wc"][i], params["bc"][i]) for i in range(BRANCHES)]

    def cbam(feat, i):
        Bb, Ff, Hh, Ww = feat.shape
        flat = feat.reshape(Bb, Ff, Hh * Ww)
        att = None
        for pt in POOL_TYPES[i % 2]:
            if pt == "avg":
                p = flat.mean(-1)
            elif pt == "max":
                p = flat.max(-1)
            elif pt == "lp":
                p = jnp.sqrt((flat ** 2).sum(-1))
            elif pt == "lse":
                s = flat.max(-1, keepdims=True)
                p = (s + jnp.log(jnp.exp(flat - s).sum(-1, keepdims=True)))[..., 0]
            h = jax.nn.relu(p @ params["w1"][i].T + params["b1"][i])
            r = h @ params["w2"][i].T + params["b2"][i]
            att = r if att is None else att + r
        xca = feat * jax.nn.sigmoid(att)[:, :, None, None]
        pm = jnp.stack([xca.max(1), xca.mean(1)], axis=1)
        conv = jax.lax.conv_general_dilated(
            pm, params["ws"][i] * bn_scale, (1, 1), ((3, 3), (3, 3)),
            dimension_numbers=("NCHW", "OIHW", "NCHW"))
        return xca * jax.nn.sigmoid(conv)

    a = cbam(feats[0], 0) + feats[0]
    b = cbam(feats[1], 1) + feats[1]
    z = jnp.concatenate([a * b, a + b, x], axis=1)
    return jnp.einsum("oi,bihw->bohw", params["wout"], z) + params["bout"][None, :, None, None]


if __name__ == "__main__":
    # branches=2, in_channels=4, out_channels=6, conv_filters=gate_channels=8,
    # attention_reduction=2, H=W=16
    Cin, H, W = 4, 16, 16
    F, Fr, Cout = 8, 4, 6

    key = jax.random.PRNGKey(0)
    keys = jax.random.split(key, 8)

    def xavier(k, shape, fan_in, fan_out):
        std = math.sqrt(2.0 / (fan_in + fan_out))
        return (std * jax.random.normal(k, shape)).astype(jnp.float32)

    params = {
        "wc": xavier(keys[0], (BRANCHES, F, Cin), Cin, F),              # branch 1x1 convs
        "bc": jnp.zeros((BRANCHES, F), jnp.float32),                    # bias -> 0 (default_init_weights)
        "w1": (0.3 * jax.random.normal(keys[1], (BRANCHES, Fr, F))).astype(jnp.float32),
        "b1": (0.1 * jax.random.normal(keys[2], (BRANCHES, Fr))).astype(jnp.float32),
        "w2": (0.3 * jax.random.normal(keys[3], (BRANCHES, F, Fr))).astype(jnp.float32),
        "b2": (0.1 * jax.random.normal(keys[4], (BRANCHES, F))).astype(jnp.float32),
        "ws": (0.2 * jax.random.normal(keys[5], (BRANCHES, 1, 2, KS, KS))).astype(jnp.float32),
        "wout": xavier(keys[6], (Cout, BRANCHES * F + Cin), BRANCHES * F + Cin, Cout),
        "bout": jnp.zeros((Cout,), jnp.float32),                        # bias -> 0
    }

    # B=2 exercises the degenerate Bt=1 path (2 parallel grid steps);
    # B=4 exercises the batched lane-folding path (Bt=2) with a 2-step parallel grid.
    for B in (2, 4):
        x = jax.random.normal(jax.random.fold_in(keys[7], B), (B, Cin, H, W), jnp.float32)
        out = jax.block_until_ready(divergent_attention_forward(x, params))
        assert out.shape == (B, Cout, H, W), out.shape

        ref = reference_forward(x, params)
        max_err = float(jnp.max(jnp.abs(out - ref)))
        # Big dots run with bf16 operands / f32 accumulation (same class as the default
        # MXU precision the previous passing version used), so bf16-class tolerance.
        assert jnp.allclose(out, ref, atol=6e-2, rtol=2e-2), f"B={B} max abs err {max_err}"

    print("KERNEL_OK")
</pallas_src>

<mosaic_0001>
module attributes {stable_mosaic.version = 11 : i64} {
  func.func @kernel(%arg0: i32, %arg1: memref<4x256xf32, #tpu.memory_space<vmem>>, %arg2: memref<1024x512xbf16, #tpu.memory_space<vmem>>, %arg3: memref<96x128xf32, #tpu.memory_space<vmem>>, %arg4: memref<6x256xf32, #tpu.memory_space<vmem>>) attributes {dimension_semantics = [#tpu.dimension_semantics<parallel>], iteration_bounds = array<i64: 2>, scalar_prefetch = 0 : i64, scratch_operands = 0 : i64, tpu.core_type = #tpu.core_type<tc>, window_params = [{transform_indices = @transform_0, window_bounds = array<i64: 4, 256>}, {pipeline_mode = #tpu.pipeline_mode<synchronous>, transform_indices = @transform_1, window_bounds = array<i64: 1024, 512>}, {pipeline_mode = #tpu.pipeline_mode<synchronous>, transform_indices = @transform_2, window_bounds = array<i64: 96, 128>}, {transform_indices = @transform_3, window_bounds = array<i64: 6, 256>}]} {
    %c0 = arith.constant 0 : index
    %c0_0 = arith.constant 0 : index
    %0 = vector.load %arg1[%c0, %c0_0] : memref<4x256xf32, #tpu.memory_space<vmem>>, vector<4x256xf32>
    %1 = arith.truncf %0 : vector<4x256xf32> to vector<4x256xbf16>
    %c0_1 = arith.constant 0 : index
    %c0_2 = arith.constant 0 : index
    %2 = vector.load %arg3[%c0_1, %c0_2] : memref<96x128xf32, #tpu.memory_space<vmem>>, vector<16x4xf32>
    %c16 = arith.constant 16 : index
    %c0_3 = arith.constant 0 : index
    %3 = vector.load %arg3[%c16, %c0_3] : memref<96x128xf32, #tpu.memory_space<vmem>>, vector<6x20xf32>
    %c24 = arith.constant 24 : index
    %c0_4 = arith.constant 0 : index
    %4 = vector.load %arg3[%c24, %c0_4] : memref<96x128xf32, #tpu.memory_space<vmem>>, vector<8x16xf32>
    %c32 = arith.constant 32 : index
    %c0_5 = arith.constant 0 : index
    %5 = vector.load %arg3[%c32, %c0_5] : memref<96x128xf32, #tpu.memory_space<vmem>>, vector<16x8xf32>
    %c48 = arith.constant 48 : index
    %c0_6 = arith.constant 0 : index
    %6 = vector.load %arg3[%c48, %c0_6] : memref<96x128xf32, #tpu.memory_space<vmem>>, vector<16x1xf32>
    %c64 = arith.constant 64 : index
    %c0_7 = arith.constant 0 : index
    %7 = vector.load %arg3[%c64, %c0_7] : memref<96x128xf32, #tpu.memory_space<vmem>>, vector<8x1xf32>
    %c72 = arith.constant 72 : index
    %c0_8 = arith.constant 0 : index
    %8 = vector.load %arg3[%c72, %c0_8] : memref<96x128xf32, #tpu.memory_space<vmem>>, vector<16x1xf32>
    %c88 = arith.constant 88 : index
    %c0_9 = arith.constant 0 : index
    %9 = vector.load %arg3[%c88, %c0_9] : memref<96x128xf32, #tpu.memory_space<vmem>>, vector<6x1xf32>
    %10 = arith.truncf %2 : vector<16x4xf32> to vector<16x4xbf16>
    %cst = arith.constant dense<0.000000e+00> : vector<16x256xf32>
    %11 = tpu.matmul %10, %1, %cst {dimension_numbers = #tpu.dot_dimension_numbers<[1], [0], [0], [1], [0, 0, 1, 1], [], []>} : vector<16x4xbf16>, vector<4x256xbf16>, vector<16x256xf32> -> vector<16x256xf32>
    %12 = vector.broadcast %6 : vector<16x1xf32> to vector<16x256xf32>
    %13 = arith.addf %11, %12 : vector<16x256xf32>
    %14 = vector.extract_strided_slice %13 {offsets = [0, 0], sizes = [8, 256], strides = [1, 1]} : vector<16x256xf32> to vector<8x256xf32>
    %15 = vector.extract_strided_slice %13 {offsets = [8, 0], sizes = [8, 256], strides = [1, 1]} : vector<16x256xf32> to vector<8x256xf32>
    %cst_10 = arith.constant dense<0.000000e+00> : vector<8xf32>
    %16 = vector.multi_reduction <add>, %14, %cst_10 [1] : vector<8x256xf32> to vector<8xf32>
    %17 = vector.shape_cast %16 : vector<8xf32> to vector<8x1xf32>
    %cst_11 = arith.constant 2.560000e+02 : f32
    %18 = vector.broadcast %cst_11 : f32 to vector<8x1xf32>
    %19 = arith.divf %17, %18 : vector<8x1xf32>
    %cst_12 = arith.constant dense<0xFF800000> : vector<8xf32>
    %20 = vector.multi_reduction <maximumf>, %14, %cst_12 [1] : vector<8x256xf32> to vector<8xf32>
    %21 = vector.shape_cast %20 : vector<8xf32> to vector<8x1xf32>
    %22 = arith.mulf %15, %15 : vector<8x256xf32>
    %cst_13 = arith.constant dense<0.000000e+00> : vector<8xf32>
    %23 = vector.multi_reduction <add>, %22, %cst_13 [1] : vector<8x256xf32> to vector<8xf32>
    %24 = vector.shape_cast %23 : vector<8xf32> to vector<8x1xf32>
    %25 = math.sqrt %24 : vector<8x1xf32>
    %cst_14 = arith.constant dense<0xFF800000> : vector<8xf32>
    %26 = vector.multi_reduction <maximumf>, %15, %cst_14 [1] : vector<8x256xf32> to vector<8xf32>
    %27 = vector.shape_cast %26 : vector<8xf32> to vector<8x1xf32>
    %28 = vector.broadcast %27 : vector<8x1xf32> to vector<8x256xf32>
    %29 = arith.subf %15, %28 : vector<8x256xf32>
    %30 = math.exp %29 : vector<8x256xf32>
    %cst_15 = arith.constant dense<0.000000e+00> : vector<8xf32>
    %31 = vector.multi_reduction <add>, %30, %cst_15 [1] : vector<8x256xf32> to vector<8xf32>
    %32 = vector.shape_cast %31 : vector<8xf32> to vector<8x1xf32>
    %33 = math.log %32 : vector<8x1xf32>
    %34 = arith.addf %27, %33 : vector<8x1xf32>
    %35 = tpu.concatenate %19, %25 in 0 : vector<8x1xf32>, vector<8x1xf32> -> vector<16x1xf32>
    %36 = tpu.concatenate %21, %34 in 0 : vector<8x1xf32>, vector<8x1xf32> -> vector<16x1xf32>
    %37 = tpu.iota {dimensions = array<i32: 1>} : vector<16x2xi32>
    %cst_16 = arith.constant 0.000000e+00 : f32
    %38 = vector.broadcast %cst_16 : f32 to vector<16x2xf32>
    %c0_i32 = arith.constant 0 : i32
    %39 = vector.broadcast %c0_i32 : i32 to vector<16x2xi32>
    %40 = arith.cmpi eq, %37, %39 : vector<16x2xi32>
    %41 = vector.shape_cast %35 : vector<16x1xf32> to vector<16x1xf32>
    %42 = vector.broadcast %41 : vector<16x1xf32> to vector<16x2xf32>
    %43 = arith.select %40, %42, %38 : vector<16x2xi1>, vector<16x2xf32>
    %c1_i32 = arith.constant 1 : i32
    %44 = vector.broadcast %c1_i32 : i32 to vector<16x2xi32>
    %45 = arith.cmpi eq, %37, %44 : vector<16x2xi32>
    %46 = vector.shape_cast %36 : vector<16x1xf32> to vector<16x1xf32>
    %47 = vector.broadcast %46 : vector<16x1xf32> to vector<16x2xf32>
    %48 = arith.select %45, %47, %43 : vector<16x2xi1>, vector<16x2xf32>
    %cst_17 = arith.constant dense<0.000000e+00> : vector<8x2xf32>
    %49 = tpu.matmul %4, %48, %cst_17 {dimension_numbers = #tpu.dot_dimension_numbers<[1], [0], [0], [1], [0, 0, 1, 1], [], []>} : vector<8x16xf32>, vector<16x2xf32>, vector<8x2xf32> -> vector<8x2xf32>
    %50 = vector.broadcast %7 : vector<8x1xf32> to vector<8x2xf32>
    %51 = arith.addf %49, %50 : vector<8x2xf32>
    %cst_18 = arith.constant 0.000000e+00 : f32
    %52 = vector.broadcast %cst_18 : f32 to vector<8x2xf32>
    %53 = arith.maximumf %51, %52 : vector<8x2xf32>
    %cst_19 = arith.constant dense<0.000000e+00> : vector<16x2xf32>
    %54 = tpu.matmul %5, %53, %cst_19 {dimension_numbers = #tpu.dot_dimension_numbers<[1], [0], [0], [1], [0, 0, 1, 1], [], []>} : vector<16x8xf32>, vector<8x2xf32>, vector<16x2xf32> -> vector<16x2xf32>
    %55 = vector.broadcast %8 : vector<16x1xf32> to vector<16x2xf32>
    %56 = arith.addf %54, %55 : vector<16x2xf32>
    %57 = vector.extract_strided_slice %56 {offsets = [0, 0], sizes = [16, 1], strides = [1, 1]} : vector<16x2xf32> to vector<16x1xf32>
    %58 = vector.extract_strided_slice %56 {offsets = [0, 1], sizes = [16, 1], strides = [1, 1]} : vector<16x2xf32> to vector<16x1xf32>
    %59 = arith.addf %57, %58 : vector<16x1xf32>
    %60 = arith.negf %59 : vector<16x1xf32>
    %61 = math.exp %60 : vector<16x1xf32>
    %cst_20 = arith.constant 1.000000e+00 : f32
    %62 = vector.broadcast %cst_20 : f32 to vector<16x1xf32>
    %63 = arith.addf %62, %61 : vector<16x1xf32>
    %64 = arith.divf %62, %63 : vector<16x1xf32>
    %65 = vector.extract_strided_slice %13 {offsets = [0, 0], sizes = [8, 256], strides = [1, 1]} : vector<16x256xf32> to vector<8x256xf32>
    %66 = vector.extract_strided_slice %13 {offsets = [8, 0], sizes = [8, 256], strides = [1, 1]} : vector<16x256xf32> to vector<8x256xf32>
    %67 = vector.extract_strided_slice %64 {offsets = [0, 0], sizes = [8, 1], strides = [1, 1]} : vector<16x1xf32> to vector<8x1xf32>
    %68 = vector.broadcast %67 : vector<8x1xf32> to vector<8x256xf32>
    %69 = arith.mulf %65, %68 : vector<8x256xf32>
    %70 = vector.extract_strided_slice %64 {offsets = [8, 0], sizes = [8, 1], strides = [1, 1]} : vector<16x1xf32> to vector<8x1xf32>
    %71 = vector.broadcast %70 : vector<8x1xf32> to vector<8x256xf32>
    %72 = arith.mulf %66, %71 : vector<8x256xf32>
    %cst_21 = arith.constant dense<0xFF800000> : vector<256xf32>
    %73 = vector.multi_reduction <maximumf>, %69, %cst_21 [0] : vector<8x256xf32> to vector<256xf32>
    %74 = vector.shape_cast %73 : vector<256xf32> to vector<1x256xf32>
    %cst_22 = arith.constant dense<0.000000e+00> : vector<256xf32>
    %75 = vector.multi_reduction <add>, %69, %cst_22 [0] : vector<8x256xf32> to vector<256xf32>
    %76 = vector.shape_cast %75 : vector<256xf32> to vector<1x256xf32>
    %cst_23 = arith.constant 8.000000e+00 : f32
    %77 = vector.broadcast %cst_23 : f32 to vector<1x256xf32>
    %78 = arith.divf %76, %77 : vector<1x256xf32>
    %cst_24 = arith.constant dense<0xFF800000> : vector<256xf32>
    %79 = vector.multi_reduction <maximumf>, %72, %cst_24 [0] : vector<8x256xf32> to vector<256xf32>
    %80 = vector.shape_cast %79 : vector<256xf32> to vector<1x256xf32>
    %cst_25 = arith.constant dense<0.000000e+00> : vector<256xf32>
    %81 = vector.multi_reduction <add>, %72, %cst_25 [0] : vector<8x256xf32> to vector<256xf32>
    %82 = vector.shape_cast %81 : vector<256xf32> to vector<1x256xf32>
    %cst_26 = arith.constant 8.000000e+00 : f32
    %83 = vector.broadcast %cst_26 : f32 to vector<1x256xf32>
    %84 = arith.divf %82, %83 : vector<1x256xf32>
    %85 = tpu.concatenate %74, %78, %80, %84 in 1 : vector<1x256xf32>, vector<1x256xf32>, vector<1x256xf32>, vector<1x256xf32> -> vector<1x1024xf32>
    %86 = tpu.iota {dimensions = array<i32: 0>} : vector<1x1024xi32>
    %cst_27 = arith.constant 0.000000e+00 : f32
    %87 = vector.broadcast %cst_27 : f32 to vector<1x1024xf32>
    %c0_i32_28 = arith.constant 0 : i32
    %88 = vector.broadcast %c0_i32_28 : i32 to vector<1x1024xi32>
    %89 = arith.cmpi eq, %86, %88 : vector<1x1024xi32>
    %90 = arith.select %89, %85, %87 : vector<1x1024xi1>, vector<1x1024xf32>
    %91 = arith.truncf %90 : vector<1x1024xf32> to vector<1x1024xbf16>
    %c0_29 = arith.constant 0 : index
    %c0_30 = arith.constant 0 : index
    %92 = vector.load %arg2[%c0_29, %c0_30] : memref<1024x512xbf16, #tpu.memory_space<vmem>>, vector<1024x512xbf16>
    %cst_31 = arith.constant dense<0.000000e+00> : vector<1x512xf32>
    %93 = tpu.matmul %91, %92, %cst_31 {dimension_numbers = #tpu.dot_dimension_numbers<[1], [0], [0], [1], [0, 0, 1, 1], [], []>} : vector<1x1024xbf16>, vector<1024x512xbf16>, vector<1x512xf32> -> vector<1x512xf32>
    %94 = arith.negf %93 : vector<1x512xf32>
    %95 = math.exp %94 : vector<1x512xf32>
    %cst_32 = arith.constant 1.000000e+00 : f32
    %96 = vector.broadcast %cst_32 : f32 to vector<1x512xf32>
    %97 = arith.addf %96, %95 : vector<1x512xf32>
    %98 = arith.divf %96, %97 : vector<1x512xf32>
    %99 = vector.extract_strided_slice %13 {offsets = [0, 0], sizes = [8, 256], strides = [1, 1]} : vector<16x256xf32> to vector<8x256xf32>
    %100 = vector.extract_strided_slice %13 {offsets = [8, 0], sizes = [8, 256], strides = [1, 1]} : vector<16x256xf32> to vector<8x256xf32>
    %101 = vector.extract_strided_slice %98 {offsets = [0, 0], sizes = [1, 256], strides = [1, 1]} : vector<1x512xf32> to vector<1x256xf32>
    %102 = vector.broadcast %101 : vector<1x256xf32> to vector<8x256xf32>
    %103 = arith.mulf %69, %102 : vector<8x256xf32>
    %104 = arith.addf %103, %99 : vector<8x256xf32>
    %105 = vector.extract_strided_slice %98 {offsets = [0, 256], sizes = [1, 256], strides = [1, 1]} : vector<1x512xf32> to vector<1x256xf32>
    %106 = vector.broadcast %105 : vector<1x256xf32> to vector<8x256xf32>
    %107 = arith.mulf %72, %106 : vector<8x256xf32>
    %108 = arith.addf %107, %100 : vector<8x256xf32>
    %109 = arith.mulf %104, %108 : vector<8x256xf32>
    %110 = arith.addf %104, %108 : vector<8x256xf32>
    %111 = tpu.concatenate %109, %110, %0 in 0 : vector<8x256xf32>, vector<8x256xf32>, vector<4x256xf32> -> vector<20x256xf32>
    %112 = arith.truncf %3 : vector<6x20xf32> to vector<6x20xbf16>
    %113 = arith.truncf %111 : vector<20x256xf32> to vector<20x256xbf16>
    %cst_33 = arith.constant dense<0.000000e+00> : vector<6x256xf32>
    %114 = tpu.matmul %112, %113, %cst_33 {dimension_numbers = #tpu.dot_dimension_numbers<[1], [0], [0], [1], [0, 0, 1, 1], [], []>} : vector<6x20xbf16>, vector<20x256xbf16>, vector<6x256xf32> -> vector<6x256xf32>
    %115 = vector.broadcast %9 : vector<6x1xf32> to vector<6x256xf32>
    %116 = arith.addf %114, %115 : vector<6x256xf32>
    %c0_34 = arith.constant 0 : index
    %c0_35 = arith.constant 0 : index
    %117 = vector.load %arg4[%c0_34, %c0_35] : memref<6x256xf32, #tpu.memory_space<vmem>>, vector<6x256xf32>
    tpu.vector_store %arg4[%c0_34, %c0_35], %116 {strides = array<i32>} : memref<6x256xf32, #tpu.memory_space<vmem>>, vector<6x256xf32>,
    return
  }
  func.func @transform_0(%arg0: i32) -> (i32, i32) {
    %c0_i32 = arith.constant 0 : i32
    %c0_i32_0 = arith.constant 0 : i32
    return %c0_i32, %arg0 : i32, i32
  }
  func.func @transform_1(%arg0: i32) -> (i32, i32) {
    %c0_i32 = arith.constant 0 : i32
    %c0_i32_0 = arith.constant 0 : i32
    %c0_i32_1 = arith.constant 0 : i32
    return %c0_i32, %c0_i32_0 : i32, i32
  }
  func.func @transform_2(%arg0: i32) -> (i32, i32) {
    %c0_i32 = arith.constant 0 : i32
    %c0_i32_0 = arith.constant 0 : i32
    %c0_i32_1 = arith.constant 0 : i32
    return %c0_i32, %c0_i32_0 : i32, i32
  }
  func.func @transform_3(%arg0: i32) -> (i32, i32) {
    %c0_i32 = arith.constant 0 : i32
    %c0_i32_0 = arith.constant 0 : i32
    return %c0_i32, %arg0 : i32, i32
  }
}

</mosaic_0001>

<llo_original>
// kernel: tpu_custom_call.1
$region0: #{tpu_custom_call.1}
  #allocation0 [shape = 'u32[]', space=smem, size = 0x4, offset = 0x4, fixed_abs, tag = 'smem constant byte address 0x4 - core index']
  #allocation1 [shape = 'u32[144,128]{1,0:T(1,128)}', space=vmem, size = 0x12000, scoped, tag = 'internal scratch']
  %s0 = inlined_call_operand.hbm [shape: f32[4,512], index: 0, kind: input, shape index: {}]
  %s1 = inlined_call_operand.hbm [shape: bf16[1024,512], index: 1, kind: input, shape index: {}]
  %s2 = inlined_call_operand.hbm [shape: f32[96,128], index: 2, kind: input, shape index: {}]
  %s3 = inlined_call_operand.hbm [shape: f32[6,512], index: 3, kind: output, shape index: {}]
  %s4 = sld [smem:[#allocation0]]
  $region57: #{tpu_custom_call.1} parent=0
    _
  %s6 = ssub.s32 1, %s4
  %s7 = scalar_select 0, %s6, %s4
  $region1: #{tpu_custom_call.1} parent=0
    #allocation2 [shape = 'u8[8192]{0}', space=vmem, size = 0x2000, scoped, tag = 'input window, operand 0']
    #allocation3 [shape = 's32[2]{0}', space=sflag, size = 0x8, scoped, tag = 'scoped memory for tpu_custom_call.1']
    #allocation4 [shape = 's32[2]{0}', space=sflag, size = 0x8, scoped, tag = 'scoped memory for tpu_custom_call.1']
    #allocation5 [shape = 'u8[1048576]{0}', space=vmem, size = 0x100000, scoped, tag = 'input window, operand 1, single buffered']
    #allocation6 [shape = 's32[1]{0}', space=sflag, size = 0x4, scoped, tag = 'scoped memory for tpu_custom_call.1']
    #allocation7 [shape = 'u8[49152]{0}', space=vmem, size = 0xc000, scoped, tag = 'input window, operand 2, single buffered']
    #allocation8 [shape = 'u8[16384]{0}', space=vmem, size = 0x4000, scoped, tag = 'output window, operand 0']
    %8 = vsyncpa [#allocation3], 0
    %s9 = scalar_lea.sflag [#allocation3], 1
    %10 = vsyncpa %s9, 0
    %11 = vsyncpa [#allocation6], 0
    %12 = vsyncpa [#allocation4], 0
    %s13 = scalar_lea.sflag [#allocation4], 1
    %14 = vsyncpa %s13, 0
    loop: start=0, step=1, limit=4
    $region2: #{tpu_custom_call.1} parent=1 // loop_pre_header
      _
    $region3: #{tpu_custom_call.1} parent=1 // loop_header
      %s16 = sphi 0, %s20
      %p17 = scmp.ge.s32.totalorder %s16, 4
      %s26 = sphi 0, %s28
      %s29 = sphi 0, %s26
      %s30 = sphi 0, %s29
      %s46 = sphi 0, %s30
      %s50 = sphi 0, %s50
      %s52 = sphi 0, %s50
      %s53 = sphi 0, %s52
      %s67 = sphi 0, %s53
      %s71 = sphi 0, %s71
      %s73 = sphi 0, %s71
      %s74 = sphi 0, %s73
      %s88 = sphi 0, %s74
      %s94 = sphi 0, %s96
      %s97 = sphi 0, %s94
      %s98 = sphi 0, %s97
      %s114 = sphi 0, %s98
    $region4: #{tpu_custom_call.1} parent=1 // loop_header_branch
      %19 = sbr.rel (%p17) target = $region8
    $region5: #{tpu_custom_call.1} parent=1 // loop_body
      %s21 = ssub.s32 %s16, 1
      %s22 = ssub.s32 %s16, 2
      %s23 = sadd.s32 %s16, 1
      %s24 = ssub.s32 %s16, %s23
      %p25 = scmp.eq.s32.totalorder %s24, 0
      %s27 = sadd.s32 %s26, 1
      %s28 = scalar_select %p25, %s26, %s27
      %p31 = pneg %p25
      %p32 = scmp.eq.s32.totalorder %s16, 1
      %p33 = por %p31, %p32
      %p34 = scmp.ne.s32.totalorder %s26, %s29
      %p35 = scmp.eq.s32.totalorder %s16, 0
      %p36 = por %p34, %p35
      %p37 = scmp.ne.s32.totalorder %s26, %s29
      %p38 = scmp.eq.s32.totalorder %s21, 1
      %p39 = por %p37, %p38
      %p40 = scmp.ne.s32.totalorder %s29, %s30
      %p41 = scmp.eq.s32.totalorder %s21, 0
      %p42 = por %p40, %p41
      %p43 = scmp.ne.s32.totalorder %s29, %s30
      %p44 = scmp.eq.s32.totalorder %s22, 1
      %p45 = por %p43, %p44
      %p47 = scmp.ne.s32.totalorder %s30, %s46
      %p48 = scmp.eq.s32.totalorder %s22, 0
      %p49 = por %p47, %p48
      %s51 = sadd.s32 %s50, 1
      %p54 = scmp.eq.s32.totalorder %s16, 1
      %p55 = scmp.ne.s32.totalorder %s50, %s52
      %p56 = scmp.eq.s32.totalorder %s16, 0
      %p57 = por %p55, %p56
      %p58 = scmp.ne.s32.totalorder %s50, %s52
      %p59 = scmp.eq.s32.totalorder %s21, 1
      %p60 = por %p58, %p59
      %p61 = scmp.ne.s32.totalorder %s52, %s53
      %p62 = scmp.eq.s32.totalorder %s21, 0
      %p63 = por %p61, %p62
      %p64 = scmp.ne.s32.totalorder %s52, %s53
      %p65 = scmp.eq.s32.totalorder %s22, 1
      %p66 = por %p64, %p65
      %p68 = scmp.ne.s32.totalorder %s53, %s67
      %p69 = scmp.eq.s32.totalorder %s22, 0
      %p70 = por %p68, %p69
      %s72 = sadd.s32 %s71, 1
      %p75 = scmp.eq.s32.totalorder %s16, 1
      %p76 = scmp.ne.s32.totalorder %s71, %s73
      %p77 = scmp.eq.s32.totalorder %s16, 0
      %p78 = por %p76, %p77
      %p79 = scmp.ne.s32.totalorder %s71, %s73
      %p80 = scmp.eq.s32.totalorder %s21, 1
      %p81 = por %p79, %p80
      %p82 = scmp.ne.s32.totalorder %s73, %s74
      %p83 = scmp.eq.s32.totalorder %s21, 0
      %p84 = por %p82, %p83
      %p85 = scmp.ne.s32.totalorder %s73, %s74
      %p86 = scmp.eq.s32.totalorder %s22, 1
      %p87 = por %p85, %p86
      %p89 = scmp.ne.s32.totalorder %s74, %s88
      %p90 = scmp.eq.s32.totalorder %s22, 0
      %p91 = por %p89, %p90
      %s92 = ssub.s32 %s16, %s23
      %p93 = scmp.eq.s32.totalorder %s92, 0
      %s95 = sadd.s32 %s94, 1
      %s96 = scalar_select %p93, %s94, %s95
      %p99 = pneg %p93
      %p100 = scmp.eq.s32.totalorder %s16, 1
      %p101 = por %p99, %p100
      %p102 = scmp.ne.s32.totalorder %s94, %s97
      %p103 = scmp.eq.s32.totalorder %s16, 0
      %p104 = por %p102, %p103
      %p105 = scmp.ne.s32.totalorder %s94, %s97
      %p106 = scmp.eq.s32.totalorder %s21, 1
      %p107 = por %p105, %p106
      %p108 = scmp.ne.s32.totalorder %s97, %s98
      %p109 = scmp.eq.s32.totalorder %s21, 0
      %p110 = por %p108, %p109
      %p111 = scmp.ne.s32.totalorder %s97, %s98
      %p112 = scmp.eq.s32.totalorder %s22, 1
      %p113 = por %p111, %p112
      %p115 = scmp.ne.s32.totalorder %s98, %s114
      %p116 = scmp.eq.s32.totalorder %s22, 0
      %p117 = por %p115, %p116
      %p118 = scmp.le.s32.totalorder 1, %s16
      %p119 = scmp.lt.s32.totalorder %s16, 3
      %p120 = pnand %p118, %p119
      %p121 = pneg %p120
      // Predicated region
      $region9: #{tpu_custom_call.1} parent=5 // pred_check
        _
      $region10: #{tpu_custom_call.1} parent=5 // pred_check_branch
        %123 = sbr.rel (%p120) target = $region12
      $region11: #{tpu_custom_call.1} parent=5 // pred_region
        %s124 = ssub.s32 %s16, 1
        // Predicated region
        $region13: #{tpu_custom_call.1} parent=11 // pred_check
          %p125 = pneg %p63
        $region14: #{tpu_custom_call.1} parent=11 // pred_check_branch
          %127 = sbr.rel (%p125) target = $region16
        $region15: #{tpu_custom_call.1} parent=11 // pred_region
          %s129 = ssub.s32 32768, 32768
          %130 = vsyncadd [#allocation6], %s129
          %s131 = sshll.u32 [#allocation5], 4
          %s132 = int_to_ptr.vmem [resolvable:$true] %s131
          %137 = dma.hbm_to_vmem [thread:$0]  %s1, 32768, %s132, [#allocation6], 256, 256, 16
        $region16: #{tpu_custom_call.1} parent=11 // pred_fallthru
          _
        // Predicated region
        $region17: #{tpu_custom_call.1} parent=11 // pred_check
          %p138 = pneg %p84
        $region18: #{tpu_custom_call.1} parent=11 // pred_check_branch
          %140 = sbr.rel (%p138) target = $region20
        $region19: #{tpu_custom_call.1} parent=11 // pred_region
          %s142 = ssub.s32 1536, 1536
          %143 = vsyncadd [#allocation6], %s142
          %s144 = sshll.u32 [#allocation7], 4
          %s145 = int_to_ptr.vmem [resolvable:$true] %s144
          %150 = dma.hbm_to_vmem [thread:$0]  %s2, 1536, %s145, [#allocation6], 128, 128, 8
        $region20: #{tpu_custom_call.1} parent=11 // pred_fallthru
          _
      $region12: #{tpu_custom_call.1} parent=5 // pred_fallthru
        _
      %p151 = scmp.lt.s32.totalorder %s16, 2
      // Predicated region
      $region21: #{tpu_custom_call.1} parent=5 // pred_check
        %p152 = pneg %p151
      $region22: #{tpu_custom_call.1} parent=5 // pred_check_branch
        %154 = sbr.rel (%p152) target = $region24
      $region23: #{tpu_custom_call.1} parent=5 // pred_region
        // Predicated region
        $region25: #{tpu_custom_call.1} parent=23 // pred_check
          %p155 = pneg %p36
        $region26: #{tpu_custom_call.1} parent=23 // pred_check_branch
          %157 = sbr.rel (%p155) target = $region28
        $region27: #{tpu_custom_call.1} parent=23 // pred_region
          %s158 = sand.u32 %s26, 1
          %s159 = scalar_lea.sflag [#allocation3], %s158
          %s160 = sand.u32 %s26, 1
          %s161 = smul.addr %s160, 8
          %s162 = scalar_lea.vmem [#allocation2], %s161
          %s163 = smul.u32 2, %s16
          %s165 = ssub.s32 128, 128
          %166 = vsyncadd %s159, %s165
          %s167 = smul.addr %s163, 64
          %s168 = scalar_lea.hbm %s0, %s167
          %s170 = sshll.u32 %s162, 4
          %s171 = int_to_ptr.vmem [resolvable:$true] %s170
          %173 = dma.hbm_to_vmem [thread:$0]  %s168, 128, %s171, %s159
        $region28: #{tpu_custom_call.1} parent=23 // pred_fallthru
          _
      $region24: #{tpu_custom_call.1} parent=5 // pred_fallthru
        _
      %p174 = scmp.le.s32.totalorder 1, %s16
      %p175 = scmp.lt.s32.totalorder %s16, 3
      %p176 = pnand %p174, %p175
      %p177 = pneg %p176
      // Predicated region
      $region29: #{tpu_custom_call.1} parent=5 // pred_check
        _
      $region30: #{tpu_custom_call.1} parent=5 // pred_check_branch
        %179 = sbr.rel (%p176) target = $region32
      $region31: #{tpu_custom_call.1} parent=5 // pred_region
        %s180 = ssub.s32 %s16, 1
        %s181 = sand.u32 %s29, 1
        %s182 = scalar_lea.sflag [#allocation3], %s181
        %s183 = sand.u32 %s29, 1
        %s184 = smul.addr %s183, 8
        %s185 = scalar_lea.vmem [#allocation2], %s184
        // Predicated region
        $region33: #{tpu_custom_call.1} parent=31 // pred_check
          %p186 = pneg %p42
        $region34: #{tpu_custom_call.1} parent=31 // pred_check_branch
          %188 = sbr.rel (%p186) target = $region36
        $region35: #{tpu_custom_call.1} parent=31 // pred_region
          %189 = dma.done %s182, 128
        $region36: #{tpu_custom_call.1} parent=31 // pred_fallthru
          _
        // Predicated region
        $region37: #{tpu_custom_call.1} parent=31 // pred_check
          %p190 = pneg %p63
        $region38: #{tpu_custom_call.1} parent=31 // pred_check_branch
          %192 = sbr.rel (%p190) target = $region40
        $region39: #{tpu_custom_call.1} parent=31 // pred_region
          %193 = dma.done [#allocation6], 32768
        $region40: #{tpu_custom_call.1} parent=31 // pred_fallthru
          _
        // Predicated region
        $region41: #{tpu_custom_call.1} parent=31 // pred_check
          %p194 = pneg %p84
        $region42: #{tpu_custom_call.1} parent=31 // pred_check_branch
          %196 = sbr.rel (%p194) target = $region44
        $region43: #{tpu_custom_call.1} parent=31 // pred_region
          %197 = dma.done [#allocation6], 1536
        $region44: #{tpu_custom_call.1} parent=31 // pred_fallthru
          _
        %s198 = sand.u32 %s29, 1
        %s199 = scalar_lea.sflag [#allocation3], %s198
        %s200 = sand.u32 %s29, 1
        %s201 = smul.addr %s200, 8
        %s202 = scalar_lea.vmem [#allocation2], %s201
        %p203 = pneg %p42
        %p204 = pneg %p39
        %p205 = pneg %p63
        %p206 = pneg %p60
        %p207 = pneg %p84
        %p208 = pneg %p81
        %p209 = pneg %p110
        %p210 = pneg %p107
        %s211 = sand.u32 %s97, 1
        %s212 = scalar_lea.sflag [#allocation4], %s211
        %s213 = sand.u32 %s97, 1
        %s214 = smul.addr %s213, 16
        %s215 = scalar_lea.vmem [#allocation8], %s214
        %s216 = smul.u32 2, %s21
        %s217 = smul.u32 2, %s21
        %v219 = vld [vmem:[%s185] sm:$0xff]
        %v221 = vcombine.high %v219, %v219
        %v223 = vpack.c.bf16 %v219, %v219
        %v224 = vpack.c.bf16 %v221, %v221
        %v225 = vld [vmem:[#allocation7] sm:$0xff]
        %v226 = vld [vmem:[#allocation7 + $0x8] sm:$0xff]
        %v227 = vld [vmem:[#allocation7 + $0x10] sm:$0x3f]
        %v228 = vld [vmem:[#allocation7 + $0x18] sm:$0xff]
        %v229 = vld [vmem:[#allocation7 + $0x20] sm:$0xff]
        %v230 = vld [vmem:[#allocation7 + $0x28] sm:$0xff]
        %v231 = vld [vmem:[#allocation7 + $0x30] sm:$0xff]
        %v232 = vld [vmem:[#allocation7 + $0x38] sm:$0xff]
        %v233 = vld [vmem:[#allocation7 + $0x40] sm:$0xff]
        %v234 = vld [vmem:[#allocation7 + $0x48] sm:$0xff]
        %v235 = vld [vmem:[#allocation7 + $0x50] sm:$0xff]
        %v236 = vld [vmem:[#allocation7 + $0x58] sm:$0x3f]
        %v237 = vpack.c.bf16 %v226, %v225
        %239 = vset.pattern.permute.xlu0 0
        %240 = vperm.xlu0 %239, %v231
        %v241 = vpop.permute.xlu0 %240
        %244 = vset.pattern.permute.xlu0 0
        %245 = vperm.xlu0 %244, %v232
        %v246 = vpop.permute.xlu0 %245
        %vm248 = vcmask 31744
        %v250 = vsel %vm248, %v237, 0
        %vm252 = vcmask 1041408
        %v254 = vsel %vm252, %v223, 0
        %v257 = vsel %vm252, %v224, 0
        %259 = vmatprep.subr.bf16.mxu0 %v257
        %260 = vmatpush1.bf16.msra.mxu0 %v254
        %261 = vmatprep.subr.bf16.mxu0 0
        %262 = vmatpush1.bf16.msra.mxu0 0
        %263 = vmatprep.subr.bf16.mxu0 0
        %264 = vmatpush1.bf16.msra.mxu0 0
        %265 = vmatprep.subr.bf16.mxu0 0
        %266 = vmatpush1.bf16.msra.mxu0 0
        %267 = vmatprep.subr.bf16.mxu0 0
        %268 = vmatpush1.bf16.msra.mxu0 0
        %269 = vmatprep.subr.bf16.mxu0 0
        %270 = vmatpush1.bf16.msra.mxu0 0
        %271 = vmatprep.subr.bf16.mxu0 0
        %272 = vmatpush1.bf16.msra.mxu0 0
        %273 = vmatprep.subr.bf16.mxu0 0
        %274 = vmatpush1.bf16.msra.mxu0 0
        %275 = vmatprep.subr.bf16.mxu0 0
        %276 = vmatpush1.bf16.msra.mxu0 0
        %277 = vmatprep.subr.bf16.mxu0 0
        %278 = vmatpush1.bf16.msra.mxu0 0
        %279 = vmatprep.subr.bf16.mxu0 0
        %280 = vmatpush1.bf16.msra.mxu0 0
        %281 = vmatprep.subr.bf16.mxu0 0
        %282 = vmatpush1.bf16.msra.mxu0 0
        %283 = vmatprep.subr.bf16.mxu0 0
        %284 = vmatpush1.bf16.msra.mxu0 0
        %285 = vmatprep.subr.bf16.mxu0 0
        %286 = vmatpush1.bf16.msra.mxu0 0
        %287 = vmatprep.subr.bf16.mxu0 0
        %288 = vmatpush1.bf16.msra.mxu0 0
        %289 = vmatprep.subr.bf16.mxu0 0
        %290 = vmatpush1.bf16.msra.mxu0 0
        %291 = vmatprep.mubr.bf16.mxu0 0
        %292 = vmatmul.mubr.bf16.gmra.mrb[0].mxu0 %v250
        %v293 = vpop.f32.mrb[0].mxu0
        %v294 = vadd.f32 %v241, %v293
        %v295 = vpop.f32.mrb[0].mxu0
        %v296 = vadd.f32 %v241, %v295
        %v297 = vpop.f32.mrb[0].mxu0
        %v298 = vadd.f32 %v246, %v297
        %v299 = vpop.f32.mrb[0].mxu0
        %v300 = vadd.f32 %v246, %v299
        %301 = vdwg.mxu0
        %v302 = vadd.f32 %v294, %v296
        %303 = vadd.xlane.f32.xlu0 %v302
        %v304 = vpop.xlane.xlu0 %303
        %v305 = vrcp.pop 256.0
        %v306 = vmul.f32 %v304, %v305
        %v307 = vmax.f32 %v294, %v296
        %308 = vmax.xlane.f32.xlu0 %v307
        %v309 = vpop.xlane.xlu0 %308
        %v310 = vmul.f32 %v298, %v298
        %v311 = vmul.f32 %v300, %v300
        %v312 = vadd.f32 %v310, %v311
        %313 = vadd.xlane.f32.xlu0 %v312
        %v314 = vpop.xlane.xlu0 %313
        %v315 = vrsqrt.pop %v314
        %v316 = vmul.f32 %v314, %v315
        %vm317 = vcmp.eq.f32.partialorder %v314, inf
        %v318 = vsel %vm317, %v314, %v316
        %vm319 = vcmp.eq.f32.partialorder %v314, 0.0
        %v320 = vand.u32 %v314, 2147483648
        %v321 = vsel %vm319, %v320, %v318
        %v322 = vmax.f32 %v298, %v300
        %323 = vmax.xlane.f32.xlu0 %v322
        %v324 = vpop.xlane.xlu0 %323
        %v325 = vsub.f32 %v298, %v324
        %v326 = vsub.f32 %v300, %v324
        %v327 = vmul.f32 %v325, 1.442695
        %v328 = vpow.pop %v327
        %v329 = vmul.f32 %v326, 1.442695
        %v330 = vpow.pop %v329
        %v331 = vadd.f32 %v328, %v330
        %332 = vadd.xlane.f32.xlu0 %v331
        %v333 = vpop.xlane.xlu0 %332
        %v334 = vlog2.pop %v333
        %v335 = vmul.f32 %v334, 0.6931472
        %v336 = vadd.f32 %v324, %v335
        %v337 = vlaneseq
        %v338 = vand.u32 %v337, 127
        %vm339 = vcmp.eq.s32.totalorder %v338, 0
        %341 = vset.pattern.permute.xlu0 0
        %342 = vperm.xlu0 %341, %v306
        %v343 = vpop.permute.xlu0 %342
        %346 = vset.pattern.permute.xlu0 0
        %347 = vperm.xlu0 %346, %v321
        %v348 = vpop.permute.xlu0 %347
        %v350 = vsel %vm339, %v343, 0.0
        %v351 = vsel %vm339, %v348, 0.0
        %vm352 = vcmp.eq.s32.totalorder %v338, 1
        %354 = vset.pattern.permute.xlu0 0
        %355 = vperm.xlu0 %354, %v309
        %v356 = vpop.permute.xlu0 %355
        %359 = vset.pattern.permute.xlu0 0
        %360 = vperm.xlu0 %359, %v336
        %v361 = vpop.permute.xlu0 %360
        %v363 = vsel %vm352, %v356, %v350
        %v364 = vsel %vm352, %v361, %v351
        %366 = vset.pattern.permute.xlu0 0
        %367 = vperm.xlu0 %366, %v233
        %v368 = vpop.permute.xlu0 %367
        %vm370 = vcmask 130048
        %v372 = vsel %vm370, %v228, 0
        %374 = vmatprep.subr.mxu0 0.0
        %375 = vmatpush1.msra.mxu0 %v363
        %376 = vmatprep.subr.mxu0 0.0
        %377 = vmatpush1.msra.mxu0 %v364
        %378 = vmatprep.subr.mxu0 0.0
        %379 = vmatpush1.msra.mxu0 0.0
        %380 = vmatprep.subr.mxu0 0.0
        %381 = vmatpush1.msra.mxu0 0.0
        %382 = vmatprep.subr.mxu0 0.0
        %383 = vmatpush1.msra.mxu0 0.0
        %384 = vmatprep.subr.mxu0 0.0
        %385 = vmatpush1.msra.mxu0 0.0
        %386 = vmatprep.subr.mxu0 0.0
        %387 = vmatpush1.msra.mxu0 0.0
        %388 = vmatprep.subr.mxu0 0.0
        %389 = vmatpush1.msra.mxu0 0.0
        %390 = vmatprep.subr.mxu0 0.0
        %391 = vmatpush1.msra.mxu0 0.0
        %392 = vmatprep.subr.mxu0 0.0
        %393 = vmatpush1.msra.mxu0 0.0
        %394 = vmatprep.subr.mxu0 0.0
        %395 = vmatpush1.msra.mxu0 0.0
        %396 = vmatprep.subr.mxu0 0.0
        %397 = vmatpush1.msra.mxu0 0.0
        %398 = vmatprep.subr.mxu0 0.0
        %399 = vmatpush1.msra.mxu0 0.0
        %400 = vmatprep.subr.mxu0 0.0
        %401 = vmatpush1.msra.mxu0 0.0
        %402 = vmatprep.subr.mxu0 0.0
        %403 = vmatpush1.msra.mxu0 0.0
        %404 = vmatprep.subr.mxu0 0.0
        %405 = vmatpush1.msra.mxu0 0.0
        %406 = vmatprep.subr.mxu0 0.0
        %407 = vmatpush1.msra.mxu0 0.0
        %408 = vmatprep.subr.mxu0 0.0
        %409 = vmatpush1.msra.mxu0 0.0
        %410 = vmatprep.subr.mxu0 0.0
        %411 = vmatpush1.msra.mxu0 0.0
        %412 = vmatprep.subr.mxu0 0.0
        %413 = vmatpush1.msra.mxu0 0.0
        %414 = vmatprep.subr.mxu0 0.0
        %415 = vmatpush1.msra.mxu0 0.0
        %416 = vmatprep.subr.mxu0 0.0
        %417 = vmatpush1.msra.mxu0 0.0
        %418 = vmatprep.subr.mxu0 0.0
        %419 = vmatpush1.msra.mxu0 0.0
        %420 = vmatprep.subr.mxu0 0.0
        %421 = vmatpush1.msra.mxu0 0.0
        %422 = vmatprep.subr.mxu0 0.0
        %423 = vmatpush1.msra.mxu0 0.0
        %424 = vmatprep.subr.mxu0 0.0
        %425 = vmatpush1.msra.mxu0 0.0
        %426 = vmatprep.subr.mxu0 0.0
        %427 = vmatpush1.msra.mxu0 0.0
        %428 = vmatprep.subr.mxu0 0.0
        %429 = vmatpush1.msra.mxu0 0.0
        %430 = vmatprep.subr.mxu0 0.0
        %431 = vmatpush1.msra.mxu0 0.0
        %432 = vmatprep.subr.mxu0 0.0
        %433 = vmatpush1.msra.mxu0 0.0
        %434 = vmatprep.subr.mxu0 0.0
        %435 = vmatpush1.msra.mxu0 0.0
        %436 = vmatprep.subr.mxu0 0.0
        %437 = vmatpush1.msra.mxu0 0.0
        %438 = vmatprep.mubr.f32.mxu0 0.0
        %439 = vmatmul.mubr.f32.gmra.mrb[0].mxu0 %v372
        %v440 = vpop.f32.mrb[0].mxu0
        %v441 = vadd.f32 %v368, %v440
        %v442 = vpop.f32.mrb[0].mxu0
        %443 = vdwg.mxu0
        %v444 = vmax.f32 %v441, 0.0
        %446 = vset.pattern.permute.xlu0 0
        %447 = vperm.xlu0 %446, %v234
        %v448 = vpop.permute.xlu0 %447
        %451 = vset.pattern.permute.xlu0 0
        %452 = vperm.xlu0 %451, %v235
        %v453 = vpop.permute.xlu0 %452
        %vm455 = vcmask 64512
        %v457 = vsel %vm455, %v229, 0
        %v460 = vsel %vm455, %v230, 0
        %462 = vmatprep.subr.mxu0 0.0
        %463 = vmatpush1.msra.mxu0 %v444
        %464 = vmatprep.subr.mxu0 0.0
        %465 = vmatpush1.msra.mxu0 0.0
        %466 = vmatprep.subr.mxu0 0.0
        %467 = vmatpush1.msra.mxu0 0.0
        %468 = vmatprep.subr.mxu0 0.0
        %469 = vmatpush1.msra.mxu0 0.0
        %470 = vmatprep.subr.mxu0 0.0
        %471 = vmatpush1.msra.mxu0 0.0
        %472 = vmatprep.subr.mxu0 0.0
        %473 = vmatpush1.msra.mxu0 0.0
        %474 = vmatprep.subr.mxu0 0.0
        %475 = vmatpush1.msra.mxu0 0.0
        %476 = vmatprep.subr.mxu0 0.0
        %477 = vmatpush1.msra.mxu0 0.0
        %478 = vmatprep.subr.mxu0 0.0
        %479 = vmatpush1.msra.mxu0 0.0
        %480 = vmatprep.subr.mxu0 0.0
        %481 = vmatpush1.msra.mxu0 0.0
        %482 = vmatprep.subr.mxu0 0.0
        %483 = vmatpush1.msra.mxu0 0.0
        %484 = vmatprep.subr.mxu0 0.0
        %485 = vmatpush1.msra.mxu0 0.0
        %486 = vmatprep.subr.mxu0 0.0
        %487 = vmatpush1.msra.mxu0 0.0
        %488 = vmatprep.subr.mxu0 0.0
        %489 = vmatpush1.msra.mxu0 0.0
        %490 = vmatprep.subr.mxu0 0.0
        %491 = vmatpush1.msra.mxu0 0.0
        %492 = vmatprep.subr.mxu0 0.0
        %493 = vmatpush1.msra.mxu0 0.0
        %494 = vmatprep.subr.mxu0 0.0
        %495 = vmatpush1.msra.mxu0 0.0
        %496 = vmatprep.subr.mxu0 0.0
        %497 = vmatpush1.msra.mxu0 0.0
        %498 = vmatprep.subr.mxu0 0.0
        %499 = vmatpush1.msra.mxu0 0.0
        %500 = vmatprep.subr.mxu0 0.0
        %501 = vmatpush1.msra.mxu0 0.0
        %502 = vmatprep.subr.mxu0 0.0
        %503 = vmatpush1.msra.mxu0 0.0
        %504 = vmatprep.subr.mxu0 0.0
        %505 = vmatpush1.msra.mxu0 0.0
        %506 = vmatprep.subr.mxu0 0.0
        %507 = vmatpush1.msra.mxu0 0.0
        %508 = vmatprep.subr.mxu0 0.0
        %509 = vmatpush1.msra.mxu0 0.0
        %510 = vmatprep.subr.mxu0 0.0
        %511 = vmatpush1.msra.mxu0 0.0
        %512 = vmatprep.subr.mxu0 0.0
        %513 = vmatpush1.msra.mxu0 0.0
        %514 = vmatprep.subr.mxu0 0.0
        %515 = vmatpush1.msra.mxu0 0.0
        %516 = vmatprep.subr.mxu0 0.0
        %517 = vmatpush1.msra.mxu0 0.0
        %518 = vmatprep.subr.mxu0 0.0
        %519 = vmatpush1.msra.mxu0 0.0
        %520 = vmatprep.subr.mxu0 0.0
        %521 = vmatpush1.msra.mxu0 0.0
        %522 = vmatprep.subr.mxu0 0.0
        %523 = vmatpush1.msra.mxu0 0.0
        %524 = vmatprep.subr.mxu0 0.0
        %525 = vmatpush1.msra.mxu0 0.0
        %526 = vmatprep.mubr.f32.mxu0 0.0
        %527 = vmatmul.mubr.f32.gmra.mrb[0].mxu0 %v457
        %v528 = vpop.f32.mrb[0].mxu0
        %v529 = vadd.f32 %v448, %v528
        %v530 = vpop.f32.mrb[0].mxu0
        %531 = vmatprep.mubr.f32.mxu0 0.0
        %532 = vmatmul.mubr.f32.gmra.mrb[0].mxu0 %v460
        %v533 = vpop.f32.mrb[0].mxu0
        %v534 = vadd.f32 %v453, %v533
        %v535 = vpop.f32.mrb[0].mxu0
        %536 = vdwg.mxu0
        %539 = vrot.lane.b32.xlu0 %v529, 127
        %v540 = vpop.permute.xlu0 %539
        %541 = vrot.lane.b32.xlu0 %v534, 127
        %v542 = vpop.permute.xlu0 %541
        %v545 = vadd.f32 %v529, %v540
        %v546 = vadd.f32 %v534, %v542
        %v547 = vxor.u32 %v545, 2147483648
        %v548 = vxor.u32 %v546, 2147483648
        %v549 = vmul.f32 %v547, 1.442695
        %v550 = vpow.pop %v549
        %v551 = vmul.f32 %v548, 1.442695
        %v552 = vpow.pop %v551
        %v553 = vadd.f32 %v550, 1.0
        %v554 = vadd.f32 %v552, 1.0
        %v555 = vrcp.pop %v553
        %v556 = vmul.f32 1.0, %v555
        %v557 = vrcp.pop %v554
        %v558 = vmul.f32 1.0, %v557
        %560 = vset.pattern.permute.xlu0 0
        %561 = vperm.xlu0 %560, %v556
        %v562 = vpop.permute.xlu0 %561
        %v564 = vmul.f32 %v294, %v562
        %v565 = vmul.f32 %v296, %v562
        %567 = vset.pattern.permute.xlu0 0
        %568 = vperm.xlu0 %567, %v558
        %v569 = vpop.permute.xlu0 %568
        %v571 = vmul.f32 %v298, %v569
        %v572 = vmul.f32 %v300, %v569
        %v573 = vrot.slane %v564, 4
        %v574 = vmax.f32 %v564, %v573
        %v575 = vrot.slane %v574, 2
        %v576 = vmax.f32 %v574, %v575
        %v577 = vrot.slane %v576, 1
        %v578 = vmax.f32 %v576, %v577
        %v579 = vrot.slane %v565, 4
        %v580 = vmax.f32 %v565, %v579
        %v581 = vrot.slane %v580, 2
        %v582 = vmax.f32 %v580, %v581
        %v583 = vrot.slane %v582, 1
        %v584 = vmax.f32 %v582, %v583
        %v585 = vrot.slane %v564, 4
        %v586 = vadd.f32 %v564, %v585
        %v587 = vrot.slane %v586, 2
        %v588 = vadd.f32 %v586, %v587
        %v589 = vrot.slane %v588, 1
        %v590 = vadd.f32 %v588, %v589
        %v591 = vrot.slane %v565, 4
        %v592 = vadd.f32 %v565, %v591
        %v593 = vrot.slane %v592, 2
        %v594 = vadd.f32 %v592, %v593
        %v595 = vrot.slane %v594, 1
        %v596 = vadd.f32 %v594, %v595
        %v597 = vrcp.pop 8.0
        %v598 = vmul.f32 %v590, %v597
        %v599 = vmul.f32 %v596, %v597
        %v600 = vrot.slane %v571, 4
        %v601 = vmax.f32 %v571, %v600
        %v602 = vrot.slane %v601, 2
        %v603 = vmax.f32 %v601, %v602
        %v604 = vrot.slane %v603, 1
        %v605 = vmax.f32 %v603, %v604
        %v606 = vrot.slane %v572, 4
        %v607 = vmax.f32 %v572, %v606
        %v608 = vrot.slane %v607, 2
        %v609 = vmax.f32 %v607, %v608
        %v610 = vrot.slane %v609, 1
        %v611 = vmax.f32 %v609, %v610
        %v612 = vrot.slane %v571, 4
        %v613 = vadd.f32 %v571, %v612
        %v614 = vrot.slane %v613, 2
        %v615 = vadd.f32 %v613, %v614
        %v616 = vrot.slane %v615, 1
        %v617 = vadd.f32 %v615, %v616
        %v618 = vrot.slane %v572, 4
        %v619 = vadd.f32 %v572, %v618
        %v620 = vrot.slane %v619, 2
        %v621 = vadd.f32 %v619, %v620
        %v622 = vrot.slane %v621, 1
        %v623 = vadd.f32 %v621, %v622
        %v624 = vmul.f32 %v617, %v597
        %v625 = vmul.f32 %v623, %v597
        %v626 = vlaneseq
        %v627 = vshrl.u32 %v626, 7
        %vm628 = vcmp.eq.s32.totalorder %v627, 0
        %v629 = vsel %vm628, %v578, 0.0
        %v630 = vsel %vm628, %v584, 0.0
        %v631 = vsel %vm628, %v598, 0.0
        %v632 = vsel %vm628, %v599, 0.0
        %v633 = vsel %vm628, %v605, 0.0
        %v634 = vsel %vm628, %v611, 0.0
        %v635 = vsel %vm628, %v624, 0.0
        %v636 = vsel %vm628, %v625, 0.0
        %v637 = vpack.c.bf16 %v629, %v629
        %v638 = vpack.c.bf16 %v630, %v630
        %v639 = vpack.c.bf16 %v631, %v631
        %v640 = vpack.c.bf16 %v632, %v632
        %v641 = vpack.c.bf16 %v633, %v633
        %v642 = vpack.c.bf16 %v634, %v634
        %v643 = vpack.c.bf16 %v635, %v635
        %v644 = vpack.c.bf16 %v636, %v636
        %v645 = vld [vmem:[#allocation5] sm:$0xff]
        %v646 = vld [vmem:[#allocation5 + $0x8] sm:$0xff]
        %v647 = vld [vmem:[#allocation5 + $0x10] sm:$0xff]
        %v648 = vld [vmem:[#allocation5 + $0x18] sm:$0xff]
        %v649 = vld [vmem:[#allocation5 + $0x20] sm:$0xff]
        %v650 = vld [vmem:[#allocation5 + $0x28] sm:$0xff]
        %v651 = vld [vmem:[#allocation5 + $0x30] sm:$0xff]
        %v652 = vld [vmem:[#allocation5 + $0x38] sm:$0xff]
        %v653 = vld [vmem:[#allocation5 + $0x40] sm:$0xff]
        %v654 = vld [vmem:[#allocation5 + $0x48] sm:$0xff]
        %v655 = vld [vmem:[#allocation5 + $0x50] sm:$0xff]
        %v656 = vld [vmem:[#allocation5 + $0x58] sm:$0xff]
        %v657 = vld [vmem:[#allocation5 + $0x60] sm:$0xff]
        %v658 = vld [vmem:[#allocation5 + $0x68] sm:$0xff]
        %v659 = vld [vmem:[#allocation5 + $0x70] sm:$0xff]
        %v660 = vld [vmem:[#allocation5 + $0x78] sm:$0xff]
        %v661 = vld [vmem:[#allocation5 + $0x80] sm:$0xff]
        %v662 = vld [vmem:[#allocation5 + $0x88] sm:$0xff]
        %v663 = vld [vmem:[#allocation5 + $0x90] sm:$0xff]
        %v664 = vld [vmem:[#allocation5 + $0x98] sm:$0xff]
        %v665 = vld [vmem:[#allocation5 + $0xa0] sm:$0xff]
        %v666 = vld [vmem:[#allocation5 + $0xa8] sm:$0xff]
        %v667 = vld [vmem:[#allocation5 + $0xb0] sm:$0xff]
        %v668 = vld [vmem:[#allocation5 + $0xb8] sm:$0xff]
        %v669 = vld [vmem:[#allocation5 + $0xc0] sm:$0xff]
        %v670 = vld [vmem:[#allocation5 + $0xc8] sm:$0xff]
        %v671 = vld [vmem:[#allocation5 + $0xd0] sm:$0xff]
        %v672 = vld [vmem:[#allocation5 + $0xd8] sm:$0xff]
        %v673 = vld [vmem:[#allocation5 + $0xe0] sm:$0xff]
        %v674 = vld [vmem:[#allocation5 + $0xe8] sm:$0xff]
        %v675 = vld [vmem:[#allocation5 + $0xf0] sm:$0xff]
        %v676 = vld [vmem:[#allocation5 + $0xf8] sm:$0xff]
        %v677 = vld [vmem:[#allocation5 + $0x100] sm:$0xff]
        %v678 = vld [vmem:[#allocation5 + $0x108] sm:$0xff]
        %v679 = vld [vmem:[#allocation5 + $0x110] sm:$0xff]
        %v680 = vld [vmem:[#allocation5 + $0x118] sm:$0xff]
        %v681 = vld [vmem:[#allocation5 + $0x120] sm:$0xff]
        %v682 = vld [vmem:[#allocation5 + $0x128] sm:$0xff]
        %v683 = vld [vmem:[#allocation5 + $0x130] sm:$0xff]
        %v684 = vld [vmem:[#allocation5 + $0x138] sm:$0xff]
        %v685 = vld [vmem:[#allocation5 + $0x140] sm:$0xff]
        %v686 = vld [vmem:[#allocation5 + $0x148] sm:$0xff]
        %v687 = vld [vmem:[#allocation5 + $0x150] sm:$0xff]
        %v688 = vld [vmem:[#allocation5 + $0x158] sm:$0xff]
        %v689 = vld [vmem:[#allocation5 + $0x160] sm:$0xff]
        %v690 = vld [vmem:[#allocation5 + $0x168] sm:$0xff]
        %v691 = vld [vmem:[#allocation5 + $0x170] sm:$0xff]
        %v692 = vld [vmem:[#allocation5 + $0x178] sm:$0xff]
        %v693 = vld [vmem:[#allocation5 + $0x180] sm:$0xff]
        %v694 = vld [vmem:[#allocation5 + $0x188] sm:$0xff]
        %v695 = vld [vmem:[#allocation5 + $0x190] sm:$0xff]
        %v696 = vld [vmem:[#allocation5 + $0x198] sm:$0xff]
        %v697 = vld [vmem:[#allocation5 + $0x1a0] sm:$0xff]
        %v698 = vld [vmem:[#allocation5 + $0x1a8] sm:$0xff]
        %v699 = vld [vmem:[#allocation5 + $0x1b0] sm:$0xff]
        %v700 = vld [vmem:[#allocation5 + $0x1b8] sm:$0xff]
        %v701 = vld [vmem:[#allocation5 + $0x1c0] sm:$0xff]
        %v702 = vld [vmem:[#allocation5 + $0x1c8] sm:$0xff]
        %v703 = vld [vmem:[#allocation5 + $0x1d0] sm:$0xff]
        %v704 = vld [vmem:[#allocation5 + $0x1d8] sm:$0xff]
        %v705 = vld [vmem:[#allocation5 + $0x1e0] sm:$0xff]
        %v706 = vld [vmem:[#allocation5 + $0x1e8] sm:$0xff]
        %v707 = vld [vmem:[#allocation5 + $0x1f0] sm:$0xff]
        %v708 = vld [vmem:[#allocation5 + $0x1f8] sm:$0xff]
        %v709 = vld [vmem:[#allocation5 + $0x200] sm:$0xff]
        %v710 = vld [vmem:[#allocation5 + $0x208] sm:$0xff]
        %v711 = vld [vmem:[#allocation5 + $0x210] sm:$0xff]
        %v712 = vld [vmem:[#allocation5 + $0x218] sm:$0xff]
        %v713 = vld [vmem:[#allocation5 + $0x220] sm:$0xff]
        %v714 = vld [vmem:[#allocation5 + $0x228] sm:$0xff]
        %v715 = vld [vmem:[#allocation5 + $0x230] sm:$0xff]
        %v716 = vld [vmem:[#allocation5 + $0x238] sm:$0xff]
        %v717 = vld [vmem:[#allocation5 + $0x240] sm:$0xff]
        %v718 = vld [vmem:[#allocation5 + $0x248] sm:$0xff]
        %v719 = vld [vmem:[#allocation5 + $0x250] sm:$0xff]
        %v720 = vld [vmem:[#allocation5 + $0x258] sm:$0xff]
        %v721 = vld [vmem:[#allocation5 + $0x260] sm:$0xff]
        %v722 = vld [vmem:[#allocation5 + $0x268] sm:$0xff]
        %v723 = vld [vmem:[#allocation5 + $0x270] sm:$0xff]
        %v724 = vld [vmem:[#allocation5 + $0x278] sm:$0xff]
        %v725 = vld [vmem:[#allocation5 + $0x280] sm:$0xff]
        %v726 = vld [vmem:[#allocation5 + $0x288] sm:$0xff]
        %v727 = vld [vmem:[#allocation5 + $0x290] sm:$0xff]
        %v728 = vld [vmem:[#allocation5 + $0x298] sm:$0xff]
        %v729 = vld [vmem:[#allocation5 + $0x2a0] sm:$0xff]
        %v730 = vld [vmem:[#allocation5 + $0x2a8] sm:$0xff]
        %v731 = vld [vmem:[#allocation5 + $0x2b0] sm:$0xff]
        %v732 = vld [vmem:[#allocation5 + $0x2b8] sm:$0xff]
        %v733 = vld [vmem:[#allocation5 + $0x2c0] sm:$0xff]
        %v734 = vld [vmem:[#allocation5 + $0x2c8] sm:$0xff]
        %v735 = vld [vmem:[#allocation5 + $0x2d0] sm:$0xff]
        %v736 = vld [vmem:[#allocation5 + $0x2d8] sm:$0xff]
        %v737 = vld [vmem:[#allocation5 + $0x2e0] sm:$0xff]
        %v738 = vld [vmem:[#allocation5 + $0x2e8] sm:$0xff]
        %v739 = vld [vmem:[#allocation5 + $0x2f0] sm:$0xff]
        %v740 = vld [vmem:[#allocation5 + $0x2f8] sm:$0xff]
        %v741 = vld [vmem:[#allocation5 + $0x300] sm:$0xff]
        %v742 = vld [vmem:[#allocation5 + $0x308] sm:$0xff]
        %v743 = vld [vmem:[#allocation5 + $0x310] sm:$0xff]
        %v744 = vld [vmem:[#allocation5 + $0x318] sm:$0xff]
        %v745 = vld [vmem:[#allocation5 + $0x320] sm:$0xff]
        %v746 = vld [vmem:[#allocation5 + $0x328] sm:$0xff]
        %v747 = vld [vmem:[#allocation5 + $0x330] sm:$0xff]
        %v748 = vld [vmem:[#allocation5 + $0x338] sm:$0xff]
        %v749 = vld [vmem:[#allocation5 + $0x340] sm:$0xff]
        %v750 = vld [vmem:[#allocation5 + $0x348] sm:$0xff]
        %v751 = vld [vmem:[#allocation5 + $0x350] sm:$0xff]
        %v752 = vld [vmem:[#allocation5 + $0x358] sm:$0xff]
        %v753 = vld [vmem:[#allocation5 + $0x360] sm:$0xff]
        %v754 = vld [vmem:[#allocation5 + $0x368] sm:$0xff]
        %v755 = vld [vmem:[#allocation5 + $0x370] sm:$0xff]
        %v756 = vld [vmem:[#allocation5 + $0x378] sm:$0xff]
        %v757 = vld [vmem:[#allocation5 + $0x380] sm:$0xff]
        %v758 = vld [vmem:[#allocation5 + $0x388] sm:$0xff]
        %v759 = vld [vmem:[#allocation5 + $0x390] sm:$0xff]
        %v760 = vld [vmem:[#allocation5 + $0x398] sm:$0xff]
        %v761 = vld [vmem:[#allocation5 + $0x3a0] sm:$0xff]
        %v762 = vld [vmem:[#allocation5 + $0x3a8] sm:$0xff]
        %v763 = vld [vmem:[#allocation5 + $0x3b0] sm:$0xff]
        %v764 = vld [vmem:[#allocation5 + $0x3b8] sm:$0xff]
        %v765 = vld [vmem:[#allocation5 + $0x3c0] sm:$0xff]
        %v766 = vld [vmem:[#allocation5 + $0x3c8] sm:$0xff]
        %v767 = vld [vmem:[#allocation5 + $0x3d0] sm:$0xff]
        %v768 = vld [vmem:[#allocation5 + $0x3d8] sm:$0xff]
        %v769 = vld [vmem:[#allocation5 + $0x3e0] sm:$0xff]
        %v770 = vld [vmem:[#allocation5 + $0x3e8] sm:$0xff]
        %v771 = vld [vmem:[#allocation5 + $0x3f0] sm:$0xff]
        %v772 = vld [vmem:[#allocation5 + $0x3f8] sm:$0xff]
        %v773 = vld [vmem:[#allocation5 + $0x400] sm:$0xff]
        %v774 = vld [vmem:[#allocation5 + $0x408] sm:$0xff]
        %v775 = vld [vmem:[#allocation5 + $0x410] sm:$0xff]
        %v776 = vld [vmem:[#allocation5 + $0x418] sm:$0xff]
        %v777 = vld [vmem:[#allocation5 + $0x420] sm:$0xff]
        %v778 = vld [vmem:[#allocation5 + $0x428] sm:$0xff]
        %v779 = vld [vmem:[#allocation5 + $0x430] sm:$0xff]
        %v780 = vld [vmem:[#allocation5 + $0x438] sm:$0xff]
        %v781 = vld [vmem:[#allocation5 + $0x440] sm:$0xff]
        %v782 = vld [vmem:[#allocation5 + $0x448] sm:$0xff]
        %v783 = vld [vmem:[#allocation5 + $0x450] sm:$0xff]
        %v784 = vld [vmem:[#allocation5 + $0x458] sm:$0xff]
        %v785 = vld [vmem:[#allocation5 + $0x460] sm:$0xff]
        %v786 = vld [vmem:[#allocation5 + $0x468] sm:$0xff]
        %v787 = vld [vmem:[#allocation5 + $0x470] sm:$0xff]
        %v788 = vld [vmem:[#allocation5 + $0x478] sm:$0xff]
        %v789 = vld [vmem:[#allocation5 + $0x480] sm:$0xff]
        %v790 = vld [vmem:[#allocation5 + $0x488] sm:$0xff]
        %v791 = vld [vmem:[#allocation5 + $0x490] sm:$0xff]
        %v792 = vld [vmem:[#allocation5 + $0x498] sm:$0xff]
        %v793 = vld [vmem:[#allocation5 + $0x4a0] sm:$0xff]
        %v794 = vld [vmem:[#allocation5 + $0x4a8] sm:$0xff]
        %v795 = vld [vmem:[#allocation5 + $0x4b0] sm:$0xff]
        %v796 = vld [vmem:[#allocation5 + $0x4b8] sm:$0xff]
        %v797 = vld [vmem:[#allocation5 + $0x4c0] sm:$0xff]
        %v798 = vld [vmem:[#allocation5 + $0x4c8] sm:$0xff]
        %v799 = vld [vmem:[#allocation5 + $0x4d0] sm:$0xff]
        %v800 = vld [vmem:[#allocation5 + $0x4d8] sm:$0xff]
        %v801 = vld [vmem:[#allocation5 + $0x4e0] sm:$0xff]
        %v802 = vld [vmem:[#allocation5 + $0x4e8] sm:$0xff]
        %v803 = vld [vmem:[#allocation5 + $0x4f0] sm:$0xff]
        %v804 = vld [vmem:[#allocation5 + $0x4f8] sm:$0xff]
        %v805 = vld [vmem:[#allocation5 + $0x500] sm:$0xff]
        %v806 = vld [vmem:[#allocation5 + $0x508] sm:$0xff]
        %v807 = vld [vmem:[#allocation5 + $0x510] sm:$0xff]
        %v808 = vld [vmem:[#allocation5 + $0x518] sm:$0xff]
        %v809 = vld [vmem:[#allocation5 + $0x520] sm:$0xff]
        %v810 = vld [vmem:[#allocation5 + $0x528] sm:$0xff]
        %v811 = vld [vmem:[#allocation5 + $0x530] sm:$0xff]
        %v812 = vld [vmem:[#allocation5 + $0x538] sm:$0xff]
        %v813 = vld [vmem:[#allocation5 + $0x540] sm:$0xff]
        %v814 = vld [vmem:[#allocation5 + $0x548] sm:$0xff]
        %v815 = vld [vmem:[#allocation5 + $0x550] sm:$0xff]
        %v816 = vld [vmem:[#allocation5 + $0x558] sm:$0xff]
        %v817 = vld [vmem:[#allocation5 + $0x560] sm:$0xff]
        %v818 = vld [vmem:[#allocation5 + $0x568] sm:$0xff]
        %v819 = vld [vmem:[#allocation5 + $0x570] sm:$0xff]
        %v820 = vld [vmem:[#allocation5 + $0x578] sm:$0xff]
        %v821 = vld [vmem:[#allocation5 + $0x580] sm:$0xff]
        %v822 = vld [vmem:[#allocation5 + $0x588] sm:$0xff]
        %v823 = vld [vmem:[#allocation5 + $0x590] sm:$0xff]
        %v824 = vld [vmem:[#allocation5 + $0x598] sm:$0xff]
        %v825 = vld [vmem:[#allocation5 + $0x5a0] sm:$0xff]
        %v826 = vld [vmem:[#allocation5 + $0x5a8] sm:$0xff]
        %v827 = vld [vmem:[#allocation5 + $0x5b0] sm:$0xff]
        %v828 = vld [vmem:[#allocation5 + $0x5b8] sm:$0xff]
        %v829 = vld [vmem:[#allocation5 + $0x5c0] sm:$0xff]
        %v830 = vld [vmem:[#allocation5 + $0x5c8] sm:$0xff]
        %v831 = vld [vmem:[#allocation5 + $0x5d0] sm:$0xff]
        %v832 = vld [vmem:[#allocation5 + $0x5d8] sm:$0xff]
        %v833 = vld [vmem:[#allocation5 + $0x5e0] sm:$0xff]
        %v834 = vld [vmem:[#allocation5 + $0x5e8] sm:$0xff]
        %v835 = vld [vmem:[#allocation5 + $0x5f0] sm:$0xff]
        %v836 = vld [vmem:[#allocation5 + $0x5f8] sm:$0xff]
        %v837 = vld [vmem:[#allocation5 + $0x600] sm:$0xff]
        %v838 = vld [vmem:[#allocation5 + $0x608] sm:$0xff]
        %v839 = vld [vmem:[#allocation5 + $0x610] sm:$0xff]
        %v840 = vld [vmem:[#allocation5 + $0x618] sm:$0xff]
        %v841 = vld [vmem:[#allocation5 + $0x620] sm:$0xff]
        %v842 = vld [vmem:[#allocation5 + $0x628] sm:$0xff]
        %v843 = vld [vmem:[#allocation5 + $0x630] sm:$0xff]
        %v844 = vld [vmem:[#allocation5 + $0x638] sm:$0xff]
        %v845 = vld [vmem:[#allocation5 + $0x640] sm:$0xff]
        %v846 = vld [vmem:[#allocation5 + $0x648] sm:$0xff]
        %v847 = vld [vmem:[#allocation5 + $0x650] sm:$0xff]
        %v848 = vld [vmem:[#allocation5 + $0x658] sm:$0xff]
        %v849 = vld [vmem:[#allocation5 + $0x660] sm:$0xff]
        %v850 = vld [vmem:[#allocation5 + $0x668] sm:$0xff]
        %v851 = vld [vmem:[#allocation5 + $0x670] sm:$0xff]
        %v852 = vld [vmem:[#allocation5 + $0x678] sm:$0xff]
        %v853 = vld [vmem:[#allocation5 + $0x680] sm:$0xff]
        %v854 = vld [vmem:[#allocation5 + $0x688] sm:$0xff]
        %v855 = vld [vmem:[#allocation5 + $0x690] sm:$0xff]
        %v856 = vld [vmem:[#allocation5 + $0x698] sm:$0xff]
        %v857 = vld [vmem:[#allocation5 + $0x6a0] sm:$0xff]
        %v858 = vld [vmem:[#allocation5 + $0x6a8] sm:$0xff]
        %v859 = vld [vmem:[#allocation5 + $0x6b0] sm:$0xff]
        %v860 = vld [vmem:[#allocation5 + $0x6b8] sm:$0xff]
        %v861 = vld [vmem:[#allocation5 + $0x6c0] sm:$0xff]
        %v862 = vld [vmem:[#allocation5 + $0x6c8] sm:$0xff]
        %v863 = vld [vmem:[#allocation5 + $0x6d0] sm:$0xff]
        %v864 = vld [vmem:[#allocation5 + $0x6d8] sm:$0xff]
        %v865 = vld [vmem:[#allocation5 + $0x6e0] sm:$0xff]
        %v866 = vld [vmem:[#allocation5 + $0x6e8] sm:$0xff]
        %v867 = vld [vmem:[#allocation5 + $0x6f0] sm:$0xff]
        %v868 = vld [vmem:[#allocation5 + $0x6f8] sm:$0xff]
        %v869 = vld [vmem:[#allocation5 + $0x700] sm:$0xff]
        %v870 = vld [vmem:[#allocation5 + $0x708] sm:$0xff]
        %v871 = vld [vmem:[#allocation5 + $0x710] sm:$0xff]
        %v872 = vld [vmem:[#allocation5 + $0x718] sm:$0xff]
        %v873 = vld [vmem:[#allocation5 + $0x720] sm:$0xff]
        %v874 = vld [vmem:[#allocation5 + $0x728] sm:$0xff]
        %v875 = vld [vmem:[#allocation5 + $0x730] sm:$0xff]
        %v876 = vld [vmem:[#allocation5 + $0x738] sm:$0xff]
        %v877 = vld [vmem:[#allocation5 + $0x740] sm:$0xff]
        %v878 = vld [vmem:[#allocation5 + $0x748] sm:$0xff]
        %v879 = vld [vmem:[#allocation5 + $0x750] sm:$0xff]
        %v880 = vld [vmem:[#allocation5 + $0x758] sm:$0xff]
        %v881 = vld [vmem:[#allocation5 + $0x760] sm:$0xff]
        %v882 = vld [vmem:[#allocation5 + $0x768] sm:$0xff]
        %v883 = vld [vmem:[#allocation5 + $0x770] sm:$0xff]
        %v884 = vld [vmem:[#allocation5 + $0x778] sm:$0xff]
        %v885 = vld [vmem:[#allocation5 + $0x780] sm:$0xff]
        %v886 = vld [vmem:[#allocation5 + $0x788] sm:$0xff]
        %v887 = vld [vmem:[#allocation5 + $0x790] sm:$0xff]
        %v888 = vld [vmem:[#allocation5 + $0x798] sm:$0xff]
        %v889 = vld [vmem:[#allocation5 + $0x7a0] sm:$0xff]
        %v890 = vld [vmem:[#allocation5 + $0x7a8] sm:$0xff]
        %v891 = vld [vmem:[#allocation5 + $0x7b0] sm:$0xff]
        %v892 = vld [vmem:[#allocation5 + $0x7b8] sm:$0xff]
        %v893 = vld [vmem:[#allocation5 + $0x7c0] sm:$0xff]
        %v894 = vld [vmem:[#allocation5 + $0x7c8] sm:$0xff]
        %v895 = vld [vmem:[#allocation5 + $0x7d0] sm:$0xff]
        %v896 = vld [vmem:[#allocation5 + $0x7d8] sm:$0xff]
        %v897 = vld [vmem:[#allocation5 + $0x7e0] sm:$0xff]
        %v898 = vld [vmem:[#allocation5 + $0x7e8] sm:$0xff]
        %v899 = vld [vmem:[#allocation5 + $0x7f0] sm:$0xff]
        %v900 = vld [vmem:[#allocation5 + $0x7f8] sm:$0xff]
        %v1157 = vunpack.c.l.b16 %v645
        %v1158 = vunpack.c.h.b16 %v645
        %v1159 = vunpack.c.l.b16 %v646
        %v1160 = vunpack.c.h.b16 %v646
        %v1161 = vunpack.c.l.b16 %v647
        %v1162 = vunpack.c.h.b16 %v647
        %v1163 = vunpack.c.l.b16 %v648
        %v1164 = vunpack.c.h.b16 %v648
        %v1165 = vunpack.c.l.b16 %v649
        %v1166 = vunpack.c.h.b16 %v649
        %v1167 = vunpack.c.l.b16 %v650
        %v1168 = vunpack.c.h.b16 %v650
        %v1169 = vunpack.c.l.b16 %v651
        %v1170 = vunpack.c.h.b16 %v651
        %v1171 = vunpack.c.l.b16 %v652
        %v1172 = vunpack.c.h.b16 %v652
        %v1173 = vunpack.c.l.b16 %v653
        %v1174 = vunpack.c.h.b16 %v653
        %v1175 = vunpack.c.l.b16 %v654
        %v1176 = vunpack.c.h.b16 %v654
        %v1177 = vunpack.c.l.b16 %v655
        %v1178 = vunpack.c.h.b16 %v655
        %v1179 = vunpack.c.l.b16 %v656
        %v1180 = vunpack.c.h.b16 %v656
        %v1181 = vunpack.c.l.b16 %v657
        %v1182 = vunpack.c.h.b16 %v657
        %v1183 = vunpack.c.l.b16 %v658
        %v1184 = vunpack.c.h.b16 %v658
        %v1185 = vunpack.c.l.b16 %v659
        %v1186 = vunpack.c.h.b16 %v659
        %v1187 = vunpack.c.l.b16 %v660
        %v1188 = vunpack.c.h.b16 %v660
        %v1189 = vunpack.c.l.b16 %v661
        %v1190 = vunpack.c.h.b16 %v661
        %v1191 = vunpack.c.l.b16 %v662
        %v1192 = vunpack.c.h.b16 %v662
        %v1193 = vunpack.c.l.b16 %v663
        %v1194 = vunpack.c.h.b16 %v663
        %v1195 = vunpack.c.l.b16 %v664
        %v1196 = vunpack.c.h.b16 %v664
        %v1197 = vunpack.c.l.b16 %v665
        %v1198 = vunpack.c.h.b16 %v665
        %v1199 = vunpack.c.l.b16 %v666
        %v1200 = vunpack.c.h.b16 %v666
        %v1201 = vunpack.c.l.b16 %v667
        %v1202 = vunpack.c.h.b16 %v667
        %v1203 = vunpack.c.l.b16 %v668
        %v1204 = vunpack.c.h.b16 %v668
        %v1205 = vunpack.c.l.b16 %v669
        %v1206 = vunpack.c.h.b16 %v669
        %v1207 = vunpack.c.l.b16 %v670
        %v1208 = vunpack.c.h.b16 %v670
        %v1209 = vunpack.c.l.b16 %v671
        %v1210 = vunpack.c.h.b16 %v671
        %v1211 = vunpack.c.l.b16 %v672
        %v1212 = vunpack.c.h.b16 %v672
        %v1213 = vunpack.c.l.b16 %v673
        %v1214 = vunpack.c.h.b16 %v673
        %v1215 = vunpack.c.l.b16 %v674
        %v1216 = vunpack.c.h.b16 %v674
        %v1217 = vunpack.c.l.b16 %v675
        %v1218 = vunpack.c.h.b16 %v675
        %v1219 = vunpack.c.l.b16 %v676
        %v1220 = vunpack.c.h.b16 %v676
        %v1221 = vunpack.c.l.b16 %v677
        %v1222 = vunpack.c.h.b16 %v677
        %v1223 = vunpack.c.l.b16 %v678
        %v1224 = vunpack.c.h.b16 %v678
        %v1225 = vunpack.c.l.b16 %v679
        %v1226 = vunpack.c.h.b16 %v679
        %v1227 = vunpack.c.l.b16 %v680
        %v1228 = vunpack.c.h.b16 %v680
        %v1229 = vunpack.c.l.b16 %v681
        %v1230 = vunpack.c.h.b16 %v681
        %v1231 = vunpack.c.l.b16 %v682
        %v1232 = vunpack.c.h.b16 %v682
        %v1233 = vunpack.c.l.b16 %v683
        %v1234 = vunpack.c.h.b16 %v683
        %v1235 = vunpack.c.l.b16 %v684
        %v1236 = vunpack.c.h.b16 %v684
        %v1237 = vunpack.c.l.b16 %v685
        %v1238 = vunpack.c.h.b16 %v685
        %v1239 = vunpack.c.l.b16 %v686
        %v1240 = vunpack.c.h.b16 %v686
        %v1241 = vunpack.c.l.b16 %v687
        %v1242 = vunpack.c.h.b16 %v687
        %v1243 = vunpack.c.l.b16 %v688
        %v1244 = vunpack.c.h.b16 %v688
        %v1245 = vunpack.c.l.b16 %v689
        %v1246 = vunpack.c.h.b16 %v689
        %v1247 = vunpack.c.l.b16 %v690
        %v1248 = vunpack.c.h.b16 %v690
        %v1249 = vunpack.c.l.b16 %v691
        %v1250 = vunpack.c.h.b16 %v691
        %v1251 = vunpack.c.l.b16 %v692
        %v1252 = vunpack.c.h.b16 %v692
        %v1253 = vunpack.c.l.b16 %v693
        %v1254 = vunpack.c.h.b16 %v693
        %v1255 = vunpack.c.l.b16 %v694
        %v1256 = vunpack.c.h.b16 %v694
        %v1257 = vunpack.c.l.b16 %v695
        %v1258 = vunpack.c.h.b16 %v695
        %v1259 = vunpack.c.l.b16 %v696
        %v1260 = vunpack.c.h.b16 %v696
        %v1261 = vunpack.c.l.b16 %v697
        %v1262 = vunpack.c.h.b16 %v697
        %v1263 = vunpack.c.l.b16 %v698
        %v1264 = vunpack.c.h.b16 %v698
        %v1265 = vunpack.c.l.b16 %v699
        %v1266 = vunpack.c.h.b16 %v699
        %v1267 = vunpack.c.l.b16 %v700
        %v1268 = vunpack.c.h.b16 %v700
        %v1269 = vunpack.c.l.b16 %v701
        %v1270 = vunpack.c.h.b16 %v701
        %v1271 = vunpack.c.l.b16 %v702
        %v1272 = vunpack.c.h.b16 %v702
        %v1273 = vunpack.c.l.b16 %v703
        %v1274 = vunpack.c.h.b16 %v703
        %v1275 = vunpack.c.l.b16 %v704
        %v1276 = vunpack.c.h.b16 %v704
        %v1277 = vunpack.c.l.b16 %v705
        %v1278 = vunpack.c.h.b16 %v705
        %v1279 = vunpack.c.l.b16 %v706
        %v1280 = vunpack.c.h.b16 %v706
        %v1281 = vunpack.c.l.b16 %v707
        %v1282 = vunpack.c.h.b16 %v707
        %v1283 = vunpack.c.l.b16 %v708
        %v1284 = vunpack.c.h.b16 %v708
        %v1285 = vunpack.c.l.b16 %v709
        %v1286 = vunpack.c.h.b16 %v709
        %v1287 = vunpack.c.l.b16 %v710
        %v1288 = vunpack.c.h.b16 %v710
        %v1289 = vunpack.c.l.b16 %v711
        %v1290 = vunpack.c.h.b16 %v711
        %v1291 = vunpack.c.l.b16 %v712
        %v1292 = vunpack.c.h.b16 %v712
        %v1293 = vunpack.c.l.b16 %v713
        %v1294 = vunpack.c.h.b16 %v713
        %v1295 = vunpack.c.l.b16 %v714
        %v1296 = vunpack.c.h.b16 %v714
        %v1297 = vunpack.c.l.b16 %v715
        %v1298 = vunpack.c.h.b16 %v715
        %v1299 = vunpack.c.l.b16 %v716
        %v1300 = vunpack.c.h.b16 %v716
        %v1301 = vunpack.c.l.b16 %v717
        %v1302 = vunpack.c.h.b16 %v717
        %v1303 = vunpack.c.l.b16 %v718
        %v1304 = vunpack.c.h.b16 %v718
        %v1305 = vunpack.c.l.b16 %v719
        %v1306 = vunpack.c.h.b16 %v719
        %v1307 = vunpack.c.l.b16 %v720
        %v1308 = vunpack.c.h.b16 %v720
        %v1309 = vunpack.c.l.b16 %v721
        %v1310 = vunpack.c.h.b16 %v721
        %v1311 = vunpack.c.l.b16 %v722
        %v1312 = vunpack.c.h.b16 %v722
        %v1313 = vunpack.c.l.b16 %v723
        %v1314 = vunpack.c.h.b16 %v723
        %v1315 = vunpack.c.l.b16 %v724
        %v1316 = vunpack.c.h.b16 %v724
        %v1317 = vunpack.c.l.b16 %v725
        %v1318 = vunpack.c.h.b16 %v725
        %v1319 = vunpack.c.l.b16 %v726
        %v1320 = vunpack.c.h.b16 %v726
        %v1321 = vunpack.c.l.b16 %v727
        %v1322 = vunpack.c.h.b16 %v727
        %v1323 = vunpack.c.l.b16 %v728
        %v1324 = vunpack.c.h.b16 %v728
        %v1325 = vunpack.c.l.b16 %v729
        %v1326 = vunpack.c.h.b16 %v729
        %v1327 = vunpack.c.l.b16 %v730
        %v1328 = vunpack.c.h.b16 %v730
        %v1329 = vunpack.c.l.b16 %v731
        %v1330 = vunpack.c.h.b16 %v731
        %v1331 = vunpack.c.l.b16 %v732
        %v1332 = vunpack.c.h.b16 %v732
        %v1333 = vunpack.c.l.b16 %v733
        %v1334 = vunpack.c.h.b16 %v733
        %v1335 = vunpack.c.l.b16 %v734
        %v1336 = vunpack.c.h.b16 %v734
        %v1337 = vunpack.c.l.b16 %v735
        %v1338 = vunpack.c.h.b16 %v735
        %v1339 = vunpack.c.l.b16 %v736
        %v1340 = vunpack.c.h.b16 %v736
        %v1341 = vunpack.c.l.b16 %v737
        %v1342 = vunpack.c.h.b16 %v737
        %v1343 = vunpack.c.l.b16 %v738
        %v1344 = vunpack.c.h.b16 %v738
        %v1345 = vunpack.c.l.b16 %v739
        %v1346 = vunpack.c.h.b16 %v739
        %v1347 = vunpack.c.l.b16 %v740
        %v1348 = vunpack.c.h.b16 %v740
        %v1349 = vunpack.c.l.b16 %v741
        %v1350 = vunpack.c.h.b16 %v741
        %v1351 = vunpack.c.l.b16 %v742
        %v1352 = vunpack.c.h.b16 %v742
        %v1353 = vunpack.c.l.b16 %v743
        %v1354 = vunpack.c.h.b16 %v743
        %v1355 = vunpack.c.l.b16 %v744
        %v1356 = vunpack.c.h.b16 %v744
        %v1357 = vunpack.c.l.b16 %v745
        %v1358 = vunpack.c.h.b16 %v745
        %v1359 = vunpack.c.l.b16 %v746
        %v1360 = vunpack.c.h.b16 %v746
        %v1361 = vunpack.c.l.b16 %v747
        %v1362 = vunpack.c.h.b16 %v747
        %v1363 = vunpack.c.l.b16 %v748
        %v1364 = vunpack.c.h.b16 %v748
        %v1365 = vunpack.c.l.b16 %v749
        %v1366 = vunpack.c.h.b16 %v749
        %v1367 = vunpack.c.l.b16 %v750
        %v1368 = vunpack.c.h.b16 %v750
        %v1369 = vunpack.c.l.b16 %v751
        %v1370 = vunpack.c.h.b16 %v751
        %v1371 = vunpack.c.l.b16 %v752
        %v1372 = vunpack.c.h.b16 %v752
        %v1373 = vunpack.c.l.b16 %v753
        %v1374 = vunpack.c.h.b16 %v753
        %v1375 = vunpack.c.l.b16 %v754
        %v1376 = vunpack.c.h.b16 %v754
        %v1377 = vunpack.c.l.b16 %v755
        %v1378 = vunpack.c.h.b16 %v755
        %v1379 = vunpack.c.l.b16 %v756
        %v1380 = vunpack.c.h.b16 %v756
        %v1381 = vunpack.c.l.b16 %v757
        %v1382 = vunpack.c.h.b16 %v757
        %v1383 = vunpack.c.l.b16 %v758
        %v1384 = vunpack.c.h.b16 %v758
        %v1385 = vunpack.c.l.b16 %v759
        %v1386 = vunpack.c.h.b16 %v759
        %v1387 = vunpack.c.l.b16 %v760
        %v1388 = vunpack.c.h.b16 %v760
        %v1389 = vunpack.c.l.b16 %v761
        %v1390 = vunpack.c.h.b16 %v761
        %v1391 = vunpack.c.l.b16 %v762
        %v1392 = vunpack.c.h.b16 %v762
        %v1393 = vunpack.c.l.b16 %v763
        %v1394 = vunpack.c.h.b16 %v763
        %v1395 = vunpack.c.l.b16 %v764
        %v1396 = vunpack.c.h.b16 %v764
        %v1397 = vunpack.c.l.b16 %v765
        %v1398 = vunpack.c.h.b16 %v765
        %v1399 = vunpack.c.l.b16 %v766
        %v1400 = vunpack.c.h.b16 %v766
        %v1401 = vunpack.c.l.b16 %v767
        %v1402 = vunpack.c.h.b16 %v767
        %v1403 = vunpack.c.l.b16 %v768
        %v1404 = vunpack.c.h.b16 %v768
        %v1405 = vunpack.c.l.b16 %v769
        %v1406 = vunpack.c.h.b16 %v769
        %v1407 = vunpack.c.l.b16 %v770
        %v1408 = vunpack.c.h.b16 %v770
        %v1409 = vunpack.c.l.b16 %v771
        %v1410 = vunpack.c.h.b16 %v771
        %v1411 = vunpack.c.l.b16 %v772
        %v1412 = vunpack.c.h.b16 %v772
        %v1413 = vunpack.c.l.b16 %v773
        %v1414 = vunpack.c.h.b16 %v773
        %v1415 = vunpack.c.l.b16 %v774
        %v1416 = vunpack.c.h.b16 %v774
        %v1417 = vunpack.c.l.b16 %v775
        %v1418 = vunpack.c.h.b16 %v775
        %v1419 = vunpack.c.l.b16 %v776
        %v1420 = vunpack.c.h.b16 %v776
        %v1421 = vunpack.c.l.b16 %v777
        %v1422 = vunpack.c.h.b16 %v777
        %v1423 = vunpack.c.l.b16 %v778
        %v1424 = vunpack.c.h.b16 %v778
        %v1425 = vunpack.c.l.b16 %v779
        %v1426 = vunpack.c.h.b16 %v779
        %v1427 = vunpack.c.l.b16 %v780
        %v1428 = vunpack.c.h.b16 %v780
        %v1429 = vunpack.c.l.b16 %v781
        %v1430 = vunpack.c.h.b16 %v781
        %v1431 = vunpack.c.l.b16 %v782
        %v1432 = vunpack.c.h.b16 %v782
        %v1433 = vunpack.c.l.b16 %v783
        %v1434 = vunpack.c.h.b16 %v783
        %v1435 = vunpack.c.l.b16 %v784
        %v1436 = vunpack.c.h.b16 %v784
        %v1437 = vunpack.c.l.b16 %v785
        %v1438 = vunpack.c.h.b16 %v785
        %v1439 = vunpack.c.l.b16 %v786
        %v1440 = vunpack.c.h.b16 %v786
        %v1441 = vunpack.c.l.b16 %v787
        %v1442 = vunpack.c.h.b16 %v787
        %v1443 = vunpack.c.l.b16 %v788
        %v1444 = vunpack.c.h.b16 %v788
        %v1445 = vunpack.c.l.b16 %v789
        %v1446 = vunpack.c.h.b16 %v789
        %v1447 = vunpack.c.l.b16 %v790
        %v1448 = vunpack.c.h.b16 %v790
        %v1449 = vunpack.c.l.b16 %v791
        %v1450 = vunpack.c.h.b16 %v791
        %v1451 = vunpack.c.l.b16 %v792
        %v1452 = vunpack.c.h.b16 %v792
        %v1453 = vunpack.c.l.b16 %v793
        %v1454 = vunpack.c.h.b16 %v793
        %v1455 = vunpack.c.l.b16 %v794
        %v1456 = vunpack.c.h.b16 %v794
        %v1457 = vunpack.c.l.b16 %v795
        %v1458 = vunpack.c.h.b16 %v795
        %v1459 = vunpack.c.l.b16 %v796
        %v1460 = vunpack.c.h.b16 %v796
        %v1461 = vunpack.c.l.b16 %v797
        %v1462 = vunpack.c.h.b16 %v797
        %v1463 = vunpack.c.l.b16 %v798
        %v1464 = vunpack.c.h.b16 %v798
        %v1465 = vunpack.c.l.b16 %v799
        %v1466 = vunpack.c.h.b16 %v799
        %v1467 = vunpack.c.l.b16 %v800
        %v1468 = vunpack.c.h.b16 %v800
        %v1469 = vunpack.c.l.b16 %v801
        %v1470 = vunpack.c.h.b16 %v801
        %v1471 = vunpack.c.l.b16 %v802
        %v1472 = vunpack.c.h.b16 %v802
        %v1473 = vunpack.c.l.b16 %v803
        %v1474 = vunpack.c.h.b16 %v803
        %v1475 = vunpack.c.l.b16 %v804
        %v1476 = vunpack.c.h.b16 %v804
        %v1477 = vunpack.c.l.b16 %v805
        %v1478 = vunpack.c.h.b16 %v805
        %v1479 = vunpack.c.l.b16 %v806
        %v1480 = vunpack.c.h.b16 %v806
        %v1481 = vunpack.c.l.b16 %v807
        %v1482 = vunpack.c.h.b16 %v807
        %v1483 = vunpack.c.l.b16 %v808
        %v1484 = vunpack.c.h.b16 %v808
        %v1485 = vunpack.c.l.b16 %v809
        %v1486 = vunpack.c.h.b16 %v809
        %v1487 = vunpack.c.l.b16 %v810
        %v1488 = vunpack.c.h.b16 %v810
        %v1489 = vunpack.c.l.b16 %v811
        %v1490 = vunpack.c.h.b16 %v811
        %v1491 = vunpack.c.l.b16 %v812
        %v1492 = vunpack.c.h.b16 %v812
        %v1493 = vunpack.c.l.b16 %v813
        %v1494 = vunpack.c.h.b16 %v813
        %v1495 = vunpack.c.l.b16 %v814
        %v1496 = vunpack.c.h.b16 %v814
        %v1497 = vunpack.c.l.b16 %v815
        %v1498 = vunpack.c.h.b16 %v815
        %v1499 = vunpack.c.l.b16 %v816
        %v1500 = vunpack.c.h.b16 %v816
        %v1501 = vunpack.c.l.b16 %v817
        %v1502 = vunpack.c.h.b16 %v817
        %v1503 = vunpack.c.l.b16 %v818
        %v1504 = vunpack.c.h.b16 %v818
        %v1505 = vunpack.c.l.b16 %v819
        %v1506 = vunpack.c.h.b16 %v819
        %v1507 = vunpack.c.l.b16 %v820
        %v1508 = vunpack.c.h.b16 %v820
        %v1509 = vunpack.c.l.b16 %v821
        %v1510 = vunpack.c.h.b16 %v821
        %v1511 = vunpack.c.l.b16 %v822
        %v1512 = vunpack.c.h.b16 %v822
        %v1513 = vunpack.c.l.b16 %v823
        %v1514 = vunpack.c.h.b16 %v823
        %v1515 = vunpack.c.l.b16 %v824
        %v1516 = vunpack.c.h.b16 %v824
        %v1517 = vunpack.c.l.b16 %v825
        %v1518 = vunpack.c.h.b16 %v825
        %v1519 = vunpack.c.l.b16 %v826
        %v1520 = vunpack.c.h.b16 %v826
        %v1521 = vunpack.c.l.b16 %v827
        %v1522 = vunpack.c.h.b16 %v827
        %v1523 = vunpack.c.l.b16 %v828
        %v1524 = vunpack.c.h.b16 %v828
        %v1525 = vunpack.c.l.b16 %v829
        %v1526 = vunpack.c.h.b16 %v829
        %v1527 = vunpack.c.l.b16 %v830
        %v1528 = vunpack.c.h.b16 %v830
        %v1529 = vunpack.c.l.b16 %v831
        %v1530 = vunpack.c.h.b16 %v831
        %v1531 = vunpack.c.l.b16 %v832
        %v1532 = vunpack.c.h.b16 %v832
        %v1533 = vunpack.c.l.b16 %v833
        %v1534 = vunpack.c.h.b16 %v833
        %v1535 = vunpack.c.l.b16 %v834
        %v1536 = vunpack.c.h.b16 %v834
        %v1537 = vunpack.c.l.b16 %v835
        %v1538 = vunpack.c.h.b16 %v835
        %v1539 = vunpack.c.l.b16 %v836
        %v1540 = vunpack.c.h.b16 %v836
        %v1541 = vunpack.c.l.b16 %v837
        %v1542 = vunpack.c.h.b16 %v837
        %v1543 = vunpack.c.l.b16 %v838
        %v1544 = vunpack.c.h.b16 %v838
        %v1545 = vunpack.c.l.b16 %v839
        %v1546 = vunpack.c.h.b16 %v839
        %v1547 = vunpack.c.l.b16 %v840
        %v1548 = vunpack.c.h.b16 %v840
        %v1549 = vunpack.c.l.b16 %v841
        %v1550 = vunpack.c.h.b16 %v841
        %v1551 = vunpack.c.l.b16 %v842
        %v1552 = vunpack.c.h.b16 %v842
        %v1553 = vunpack.c.l.b16 %v843
        %v1554 = vunpack.c.h.b16 %v843
        %v1555 = vunpack.c.l.b16 %v844
        %v1556 = vunpack.c.h.b16 %v844
        %v1557 = vunpack.c.l.b16 %v845
        %v1558 = vunpack.c.h.b16 %v845
        %v1559 = vunpack.c.l.b16 %v846
        %v1560 = vunpack.c.h.b16 %v846
        %v1561 = vunpack.c.l.b16 %v847
        %v1562 = vunpack.c.h.b16 %v847
        %v1563 = vunpack.c.l.b16 %v848
        %v1564 = vunpack.c.h.b16 %v848
        %v1565 = vunpack.c.l.b16 %v849
        %v1566 = vunpack.c.h.b16 %v849
        %v1567 = vunpack.c.l.b16 %v850
        %v1568 = vunpack.c.h.b16 %v850
        %v1569 = vunpack.c.l.b16 %v851
        %v1570 = vunpack.c.h.b16 %v851
        %v1571 = vunpack.c.l.b16 %v852
        %v1572 = vunpack.c.h.b16 %v852
        %v1573 = vunpack.c.l.b16 %v853
        %v1574 = vunpack.c.h.b16 %v853
        %v1575 = vunpack.c.l.b16 %v854
        %v1576 = vunpack.c.h.b16 %v854
        %v1577 = vunpack.c.l.b16 %v855
        %v1578 = vunpack.c.h.b16 %v855
        %v1579 = vunpack.c.l.b16 %v856
        %v1580 = vunpack.c.h.b16 %v856
        %v1581 = vunpack.c.l.b16 %v857
        %v1582 = vunpack.c.h.b16 %v857
        %v1583 = vunpack.c.l.b16 %v858
        %v1584 = vunpack.c.h.b16 %v858
        %v1585 = vunpack.c.l.b16 %v859
        %v1586 = vunpack.c.h.b16 %v859
        %v1587 = vunpack.c.l.b16 %v860
        %v1588 = vunpack.c.h.b16 %v860
        %v1589 = vunpack.c.l.b16 %v861
        %v1590 = vunpack.c.h.b16 %v861
        %v1591 = vunpack.c.l.b16 %v862
        %v1592 = vunpack.c.h.b16 %v862
        %v1593 = vunpack.c.l.b16 %v863
        %v1594 = vunpack.c.h.b16 %v863
        %v1595 = vunpack.c.l.b16 %v864
        %v1596 = vunpack.c.h.b16 %v864
        %v1597 = vunpack.c.l.b16 %v865
        %v1598 = vunpack.c.h.b16 %v865
        %v1599 = vunpack.c.l.b16 %v866
        %v1600 = vunpack.c.h.b16 %v866
        %v1601 = vunpack.c.l.b16 %v867
        %v1602 = vunpack.c.h.b16 %v867
        %v1603 = vunpack.c.l.b16 %v868
        %v1604 = vunpack.c.h.b16 %v868
        %v1605 = vunpack.c.l.b16 %v869
        %v1606 = vunpack.c.h.b16 %v869
        %v1607 = vunpack.c.l.b16 %v870
        %v1608 = vunpack.c.h.b16 %v870
        %v1609 = vunpack.c.l.b16 %v871
        %v1610 = vunpack.c.h.b16 %v871
        %v1611 = vunpack.c.l.b16 %v872
        %v1612 = vunpack.c.h.b16 %v872
        %v1613 = vunpack.c.l.b16 %v873
        %v1614 = vunpack.c.h.b16 %v873
        %v1615 = vunpack.c.l.b16 %v874
        %v1616 = vunpack.c.h.b16 %v874
        %v1617 = vunpack.c.l.b16 %v875
        %v1618 = vunpack.c.h.b16 %v875
        %v1619 = vunpack.c.l.b16 %v876
        %v1620 = vunpack.c.h.b16 %v876
        %v1621 = vunpack.c.l.b16 %v877
        %v1622 = vunpack.c.h.b16 %v877
        %v1623 = vunpack.c.l.b16 %v878
        %v1624 = vunpack.c.h.b16 %v878
        %v1625 = vunpack.c.l.b16 %v879
        %v1626 = vunpack.c.h.b16 %v879
        %v1627 = vunpack.c.l.b16 %v880
        %v1628 = vunpack.c.h.b16 %v880
        %v1629 = vunpack.c.l.b16 %v881
        %v1630 = vunpack.c.h.b16 %v881
        %v1631 = vunpack.c.l.b16 %v882
        %v1632 = vunpack.c.h.b16 %v882
        %v1633 = vunpack.c.l.b16 %v883
        %v1634 = vunpack.c.h.b16 %v883
        %v1635 = vunpack.c.l.b16 %v884
        %v1636 = vunpack.c.h.b16 %v884
        %v1637 = vunpack.c.l.b16 %v885
        %v1638 = vunpack.c.h.b16 %v885
        %v1639 = vunpack.c.l.b16 %v886
        %v1640 = vunpack.c.h.b16 %v886
        %v1641 = vunpack.c.l.b16 %v887
        %v1642 = vunpack.c.h.b16 %v887
        %v1643 = vunpack.c.l.b16 %v888
        %v1644 = vunpack.c.h.b16 %v888
        %v1645 = vunpack.c.l.b16 %v889
        %v1646 = vunpack.c.h.b16 %v889
        %v1647 = vunpack.c.l.b16 %v890
        %v1648 = vunpack.c.h.b16 %v890
        %v1649 = vunpack.c.l.b16 %v891
        %v1650 = vunpack.c.h.b16 %v891
        %v1651 = vunpack.c.l.b16 %v892
        %v1652 = vunpack.c.h.b16 %v892
        %v1653 = vunpack.c.l.b16 %v893
        %v1654 = vunpack.c.h.b16 %v893
        %v1655 = vunpack.c.l.b16 %v894
        %v1656 = vunpack.c.h.b16 %v894
        %v1657 = vunpack.c.l.b16 %v895
        %v1658 = vunpack.c.h.b16 %v895
        %v1659 = vunpack.c.l.b16 %v896
        %v1660 = vunpack.c.h.b16 %v896
        %v1661 = vunpack.c.l.b16 %v897
        %v1662 = vunpack.c.h.b16 %v897
        %v1663 = vunpack.c.l.b16 %v898
        %v1664 = vunpack.c.h.b16 %v898
        %v1665 = vunpack.c.l.b16 %v899
        %v1666 = vunpack.c.h.b16 %v899
        %v1667 = vunpack.c.l.b16 %v900
        %v1668 = vunpack.c.h.b16 %v900
        %v1669 = vpack.c.b16 %v1161, %v1157
        %v1670 = vpack.c.b16 %v1162, %v1158
        %v1671 = vpack.c.b16 %v1163, %v1159
        %v1672 = vpack.c.b16 %v1164, %v1160
        %v1673 = vpack.c.b16 %v1169, %v1165
        %v1674 = vpack.c.b16 %v1170, %v1166
        %v1675 = vpack.c.b16 %v1171, %v1167
        %v1676 = vpack.c.b16 %v1172, %v1168
        %v1677 = vpack.c.b16 %v1177, %v1173
        %v1678 = vpack.c.b16 %v1178, %v1174
        %v1679 = vpack.c.b16 %v1179, %v1175
        %v1680 = vpack.c.b16 %v1180, %v1176
        %v1681 = vpack.c.b16 %v1185, %v1181
        %v1682 = vpack.c.b16 %v1186, %v1182
        %v1683 = vpack.c.b16 %v1187, %v1183
        %v1684 = vpack.c.b16 %v1188, %v1184
        %v1685 = vpack.c.b16 %v1193, %v1189
        %v1686 = vpack.c.b16 %v1194, %v1190
        %v1687 = vpack.c.b16 %v1195, %v1191
        %v1688 = vpack.c.b16 %v1196, %v1192
        %v1689 = vpack.c.b16 %v1201, %v1197
        %v1690 = vpack.c.b16 %v1202, %v1198
        %v1691 = vpack.c.b16 %v1203, %v1199
        %v1692 = vpack.c.b16 %v1204, %v1200
        %v1693 = vpack.c.b16 %v1209, %v1205
        %v1694 = vpack.c.b16 %v1210, %v1206
        %v1695 = vpack.c.b16 %v1211, %v1207
        %v1696 = vpack.c.b16 %v1212, %v1208
        %v1697 = vpack.c.b16 %v1217, %v1213
        %v1698 = vpack.c.b16 %v1218, %v1214
        %v1699 = vpack.c.b16 %v1219, %v1215
        %v1700 = vpack.c.b16 %v1220, %v1216
        %v1701 = vpack.c.b16 %v1225, %v1221
        %v1702 = vpack.c.b16 %v1226, %v1222
        %v1703 = vpack.c.b16 %v1227, %v1223
        %v1704 = vpack.c.b16 %v1228, %v1224
        %v1705 = vpack.c.b16 %v1233, %v1229
        %v1706 = vpack.c.b16 %v1234, %v1230
        %v1707 = vpack.c.b16 %v1235, %v1231
        %v1708 = vpack.c.b16 %v1236, %v1232
        %v1709 = vpack.c.b16 %v1241, %v1237
        %v1710 = vpack.c.b16 %v1242, %v1238
        %v1711 = vpack.c.b16 %v1243, %v1239
        %v1712 = vpack.c.b16 %v1244, %v1240
        %v1713 = vpack.c.b16 %v1249, %v1245
        %v1714 = vpack.c.b16 %v1250, %v1246
        %v1715 = vpack.c.b16 %v1251, %v1247
        %v1716 = vpack.c.b16 %v1252, %v1248
        %v1717 = vpack.c.b16 %v1257, %v1253
        %v1718 = vpack.c.b16 %v1258, %v1254
        %v1719 = vpack.c.b16 %v1259, %v1255
        %v1720 = vpack.c.b16 %v1260, %v1256
        %v1721 = vpack.c.b16 %v1265, %v1261
        %v1722 = vpack.c.b16 %v1266, %v1262
        %v1723 = vpack.c.b16 %v1267, %v1263
        %v1724 = vpack.c.b16 %v1268, %v1264
        %v1725 = vpack.c.b16 %v1273, %v1269
        %v1726 = vpack.c.b16 %v1274, %v1270
        %v1727 = vpack.c.b16 %v1275, %v1271
        %v1728 = vpack.c.b16 %v1276, %v1272
        %v1729 = vpack.c.b16 %v1281, %v1277
        %v1730 = vpack.c.b16 %v1282, %v1278
        %v1731 = vpack.c.b16 %v1283, %v1279
        %v1732 = vpack.c.b16 %v1284, %v1280
        %v1733 = vpack.c.b16 %v1289, %v1285
        %v1734 = vpack.c.b16 %v1290, %v1286
        %v1735 = vpack.c.b16 %v1291, %v1287
        %v1736 = vpack.c.b16 %v1292, %v1288
        %v1737 = vpack.c.b16 %v1297, %v1293
        %v1738 = vpack.c.b16 %v1298, %v1294
        %v1739 = vpack.c.b16 %v1299, %v1295
        %v1740 = vpack.c.b16 %v1300, %v1296
        %v1741 = vpack.c.b16 %v1305, %v1301
        %v1742 = vpack.c.b16 %v1306, %v1302
        %v1743 = vpack.c.b16 %v1307, %v1303
        %v1744 = vpack.c.b16 %v1308, %v1304
        %v1745 = vpack.c.b16 %v1313, %v1309
        %v1746 = vpack.c.b16 %v1314, %v1310
        %v1747 = vpack.c.b16 %v1315, %v1311
        %v1748 = vpack.c.b16 %v1316, %v1312
        %v1749 = vpack.c.b16 %v1321, %v1317
        %v1750 = vpack.c.b16 %v1322, %v1318
        %v1751 = vpack.c.b16 %v1323, %v1319
        %v1752 = vpack.c.b16 %v1324, %v1320
        %v1753 = vpack.c.b16 %v1329, %v1325
        %v1754 = vpack.c.b16 %v1330, %v1326
        %v1755 = vpack.c.b16 %v1331, %v1327
        %v1756 = vpack.c.b16 %v1332, %v1328
        %v1757 = vpack.c.b16 %v1337, %v1333
        %v1758 = vpack.c.b16 %v1338, %v1334
        %v1759 = vpack.c.b16 %v1339, %v1335
        %v1760 = vpack.c.b16 %v1340, %v1336
        %v1761 = vpack.c.b16 %v1345, %v1341
        %v1762 = vpack.c.b16 %v1346, %v1342
        %v1763 = vpack.c.b16 %v1347, %v1343
        %v1764 = vpack.c.b16 %v1348, %v1344
        %v1765 = vpack.c.b16 %v1353, %v1349
        %v1766 = vpack.c.b16 %v1354, %v1350
        %v1767 = vpack.c.b16 %v1355, %v1351
        %v1768 = vpack.c.b16 %v1356, %v1352
        %v1769 = vpack.c.b16 %v1361, %v1357
        %v1770 = vpack.c.b16 %v1362, %v1358
        %v1771 = vpack.c.b16 %v1363, %v1359
        %v1772 = vpack.c.b16 %v1364, %v1360
        %v1773 = vpack.c.b16 %v1369, %v1365
        %v1774 = vpack.c.b16 %v1370, %v1366
        %v1775 = vpack.c.b16 %v1371, %v1367
        %v1776 = vpack.c.b16 %v1372, %v1368
        %v1777 = vpack.c.b16 %v1377, %v1373
        %v1778 = vpack.c.b16 %v1378, %v1374
        %v1779 = vpack.c.b16 %v1379, %v1375
        %v1780 = vpack.c.b16 %v1380, %v1376
        %v1781 = vpack.c.b16 %v1385, %v1381
        %v1782 = vpack.c.b16 %v1386, %v1382
        %v1783 = vpack.c.b16 %v1387, %v1383
        %v1784 = vpack.c.b16 %v1388, %v1384
        %v1785 = vpack.c.b16 %v1393, %v1389
        %v1786 = vpack.c.b16 %v1394, %v1390
        %v1787 = vpack.c.b16 %v1395, %v1391
        %v1788 = vpack.c.b16 %v1396, %v1392
        %v1789 = vpack.c.b16 %v1401, %v1397
        %v1790 = vpack.c.b16 %v1402, %v1398
        %v1791 = vpack.c.b16 %v1403, %v1399
        %v1792 = vpack.c.b16 %v1404, %v1400
        %v1793 = vpack.c.b16 %v1409, %v1405
        %v1794 = vpack.c.b16 %v1410, %v1406
        %v1795 = vpack.c.b16 %v1411, %v1407
        %v1796 = vpack.c.b16 %v1412, %v1408
        %v1797 = vpack.c.b16 %v1417, %v1413
        %v1798 = vpack.c.b16 %v1418, %v1414
        %v1799 = vpack.c.b16 %v1419, %v1415
        %v1800 = vpack.c.b16 %v1420, %v1416
        %v1801 = vpack.c.b16 %v1425, %v1421
        %v1802 = vpack.c.b16 %v1426, %v1422
        %v1803 = vpack.c.b16 %v1427, %v1423
        %v1804 = vpack.c.b16 %v1428, %v1424
        %v1805 = vpack.c.b16 %v1433, %v1429
        %v1806 = vpack.c.b16 %v1434, %v1430
        %v1807 = vpack.c.b16 %v1435, %v1431
        %v1808 = vpack.c.b16 %v1436, %v1432
        %v1809 = vpack.c.b16 %v1441, %v1437
        %v1810 = vpack.c.b16 %v1442, %v1438
        %v1811 = vpack.c.b16 %v1443, %v1439
        %v1812 = vpack.c.b16 %v1444, %v1440
        %v1813 = vpack.c.b16 %v1449, %v1445
        %v1814 = vpack.c.b16 %v1450, %v1446
        %v1815 = vpack.c.b16 %v1451, %v1447
        %v1816 = vpack.c.b16 %v1452, %v1448
        %v1817 = vpack.c.b16 %v1457, %v1453
        %v1818 = vpack.c.b16 %v1458, %v1454
        %v1819 = vpack.c.b16 %v1459, %v1455
        %v1820 = vpack.c.b16 %v1460, %v1456
        %v1821 = vpack.c.b16 %v1465, %v1461
        %v1822 = vpack.c.b16 %v1466, %v1462
        %v1823 = vpack.c.b16 %v1467, %v1463
        %v1824 = vpack.c.b16 %v1468, %v1464
        %v1825 = vpack.c.b16 %v1473, %v1469
        %v1826 = vpack.c.b16 %v1474, %v1470
        %v1827 = vpack.c.b16 %v1475, %v1471
        %v1828 = vpack.c.b16 %v1476, %v1472
        %v1829 = vpack.c.b16 %v1481, %v1477
        %v1830 = vpack.c.b16 %v1482, %v1478
        %v1831 = vpack.c.b16 %v1483, %v1479
        %v1832 = vpack.c.b16 %v1484, %v1480
        %v1833 = vpack.c.b16 %v1489, %v1485
        %v1834 = vpack.c.b16 %v1490, %v1486
        %v1835 = vpack.c.b16 %v1491, %v1487
        %v1836 = vpack.c.b16 %v1492, %v1488
        %v1837 = vpack.c.b16 %v1497, %v1493
        %v1838 = vpack.c.b16 %v1498, %v1494
        %v1839 = vpack.c.b16 %v1499, %v1495
        %v1840 = vpack.c.b16 %v1500, %v1496
        %v1841 = vpack.c.b16 %v1505, %v1501
        %v1842 = vpack.c.b16 %v1506, %v1502
        %v1843 = vpack.c.b16 %v1507, %v1503
        %v1844 = vpack.c.b16 %v1508, %v1504
        %v1845 = vpack.c.b16 %v1513, %v1509
        %v1846 = vpack.c.b16 %v1514, %v1510
        %v1847 = vpack.c.b16 %v1515, %v1511
        %v1848 = vpack.c.b16 %v1516, %v1512
        %v1849 = vpack.c.b16 %v1521, %v1517
        %v1850 = vpack.c.b16 %v1522, %v1518
        %v1851 = vpack.c.b16 %v1523, %v1519
        %v1852 = vpack.c.b16 %v1524, %v1520
        %v1853 = vpack.c.b16 %v1529, %v1525
        %v1854 = vpack.c.b16 %v1530, %v1526
        %v1855 = vpack.c.b16 %v1531, %v1527
        %v1856 = vpack.c.b16 %v1532, %v1528
        %v1857 = vpack.c.b16 %v1537, %v1533
        %v1858 = vpack.c.b16 %v1538, %v1534
        %v1859 = vpack.c.b16 %v1539, %v1535
        %v1860 = vpack.c.b16 %v1540, %v1536
        %v1861 = vpack.c.b16 %v1545, %v1541
        %v1862 = vpack.c.b16 %v1546, %v1542
        %v1863 = vpack.c.b16 %v1547, %v1543
        %v1864 = vpack.c.b16 %v1548, %v1544
        %v1865 = vpack.c.b16 %v1553, %v1549
        %v1866 = vpack.c.b16 %v1554, %v1550
        %v1867 = vpack.c.b16 %v1555, %v1551
        %v1868 = vpack.c.b16 %v1556, %v1552
        %v1869 = vpack.c.b16 %v1561, %v1557
        %v1870 = vpack.c.b16 %v1562, %v1558
        %v1871 = vpack.c.b16 %v1563, %v1559
        %v1872 = vpack.c.b16 %v1564, %v1560
        %v1873 = vpack.c.b16 %v1569, %v1565
        %v1874 = vpack.c.b16 %v1570, %v1566
        %v1875 = vpack.c.b16 %v1571, %v1567
        %v1876 = vpack.c.b16 %v1572, %v1568
        %v1877 = vpack.c.b16 %v1577, %v1573
        %v1878 = vpack.c.b16 %v1578, %v1574
        %v1879 = vpack.c.b16 %v1579, %v1575
        %v1880 = vpack.c.b16 %v1580, %v1576
        %v1881 = vpack.c.b16 %v1585, %v1581
        %v1882 = vpack.c.b16 %v1586, %v1582
        %v1883 = vpack.c.b16 %v1587, %v1583
        %v1884 = vpack.c.b16 %v1588, %v1584
        %v1885 = vpack.c.b16 %v1593, %v1589
        %v1886 = vpack.c.b16 %v1594, %v1590
        %v1887 = vpack.c.b16 %v1595, %v1591
        %v1888 = vpack.c.b16 %v1596, %v1592
        %v1889 = vpack.c.b16 %v1601, %v1597
        %v1890 = vpack.c.b16 %v1602, %v1598
        %v1891 = vpack.c.b16 %v1603, %v1599
        %v1892 = vpack.c.b16 %v1604, %v1600
        %v1893 = vpack.c.b16 %v1609, %v1605
        %v1894 = vpack.c.b16 %v1610, %v1606
        %v1895 = vpack.c.b16 %v1611, %v1607
        %v1896 = vpack.c.b16 %v1612, %v1608
        %v1897 = vpack.c.b16 %v1617, %v1613
        %v1898 = vpack.c.b16 %v1618, %v1614
        %v1899 = vpack.c.b16 %v1619, %v1615
        %v1900 = vpack.c.b16 %v1620, %v1616
        %v1901 = vpack.c.b16 %v1625, %v1621
        %v1902 = vpack.c.b16 %v1626, %v1622
        %v1903 = vpack.c.b16 %v1627, %v1623
        %v1904 = vpack.c.b16 %v1628, %v1624
        %v1905 = vpack.c.b16 %v1633, %v1629
        %v1906 = vpack.c.b16 %v1634, %v1630
        %v1907 = vpack.c.b16 %v1635, %v1631
        %v1908 = vpack.c.b16 %v1636, %v1632
        %v1909 = vpack.c.b16 %v1641, %v1637
        %v1910 = vpack.c.b16 %v1642, %v1638
        %v1911 = vpack.c.b16 %v1643, %v1639
        %v1912 = vpack.c.b16 %v1644, %v1640
        %v1913 = vpack.c.b16 %v1649, %v1645
        %v1914 = vpack.c.b16 %v1650, %v1646
        %v1915 = vpack.c.b16 %v1651, %v1647
        %v1916 = vpack.c.b16 %v1652, %v1648
        %v1917 = vpack.c.b16 %v1657, %v1653
        %v1918 = vpack.c.b16 %v1658, %v1654
        %v1919 = vpack.c.b16 %v1659, %v1655
        %v1920 = vpack.c.b16 %v1660, %v1656
        %v1921 = vpack.c.b16 %v1665, %v1661
        %v1922 = vpack.c.b16 %v1666, %v1662
        %v1923 = vpack.c.b16 %v1667, %v1663
        %v1924 = vpack.c.b16 %v1668, %v1664
        %2181 = vmatprep.subr.bf16.mxu0 %v1670
        %2182 = vmatpush1.bf16.msra.mxu0 %v1669
        %2183 = vmatprep.subr.bf16.mxu0 %v1674
        %2184 = vmatpush1.bf16.msra.mxu0 %v1673
        %2185 = vmatprep.subr.bf16.mxu0 %v1678
        %2186 = vmatpush1.bf16.msra.mxu0 %v1677
        %2187 = vmatprep.subr.bf16.mxu0 %v1682
        %2188 = vmatpush1.bf16.msra.mxu0 %v1681
        %2189 = vmatprep.subr.bf16.mxu0 %v1686
        %2190 = vmatpush1.bf16.msra.mxu0 %v1685
        %2191 = vmatprep.subr.bf16.mxu0 %v1690
        %2192 = vmatpush1.bf16.msra.mxu0 %v1689
        %2193 = vmatprep.subr.bf16.mxu0 %v1694
        %2194 = vmatpush1.bf16.msra.mxu0 %v1693
        %2195 = vmatprep.subr.bf16.mxu0 %v1698
        %2196 = vmatpush1.bf16.msra.mxu0 %v1697
        %2197 = vmatprep.subr.bf16.mxu0 %v1702
        %2198 = vmatpush1.bf16.msra.mxu0 %v1701
        %2199 = vmatprep.subr.bf16.mxu0 %v1706
        %2200 = vmatpush1.bf16.msra.mxu0 %v1705
        %2201 = vmatprep.subr.bf16.mxu0 %v1710
        %2202 = vmatpush1.bf16.msra.mxu0 %v1709
        %2203 = vmatprep.subr.bf16.mxu0 %v1714
        %2204 = vmatpush1.bf16.msra.mxu0 %v1713
        %2205 = vmatprep.subr.bf16.mxu0 %v1718
        %2206 = vmatpush1.bf16.msra.mxu0 %v1717
        %2207 = vmatprep.subr.bf16.mxu0 %v1722
        %2208 = vmatpush1.bf16.msra.mxu0 %v1721
        %2209 = vmatprep.subr.bf16.mxu0 %v1726
        %2210 = vmatpush1.bf16.msra.mxu0 %v1725
        %2211 = vmatprep.subr.bf16.mxu0 %v1730
        %2212 = vmatpush1.bf16.msra.mxu0 %v1729
        %2213 = vmatprep.mubr.bf16.mxu0 %v638
        %2214 = vmatmul.mubr.bf16.gmra.mrb[0].mxu0 %v637
        %v2215 = vpop.f32.mrb[0].mxu0
        %v2216 = vadd.f32 0.0, %v2215
        %v2217 = vpop.f32.mrb[0].mxu0
        %v2218 = vadd.f32 0.0, %v2217
        %v2219 = vpop.f32.mrb[0].mxu0
        %v2220 = vpop.f32.mrb[0].mxu0
        %2221 = vdwg.mxu0
        %2222 = vmatprep.subr.bf16.mxu0 %v1734
        %2223 = vmatpush1.bf16.msra.mxu0 %v1733
        %2224 = vmatprep.subr.bf16.mxu0 %v1738
        %2225 = vmatpush1.bf16.msra.mxu0 %v1737
        %2226 = vmatprep.subr.bf16.mxu0 %v1742
        %2227 = vmatpush1.bf16.msra.mxu0 %v1741
        %2228 = vmatprep.subr.bf16.mxu0 %v1746
        %2229 = vmatpush1.bf16.msra.mxu0 %v1745
        %2230 = vmatprep.subr.bf16.mxu0 %v1750
        %2231 = vmatpush1.bf16.msra.mxu0 %v1749
        %2232 = vmatprep.subr.bf16.mxu0 %v1754
        %2233 = vmatpush1.bf16.msra.mxu0 %v1753
        %2234 = vmatprep.subr.bf16.mxu0 %v1758
        %2235 = vmatpush1.bf16.msra.mxu0 %v1757
        %2236 = vmatprep.subr.bf16.mxu0 %v1762
        %2237 = vmatpush1.bf16.msra.mxu0 %v1761
        %2238 = vmatprep.subr.bf16.mxu0 %v1766
        %2239 = vmatpush1.bf16.msra.mxu0 %v1765
        %2240 = vmatprep.subr.bf16.mxu0 %v1770
        %2241 = vmatpush1.bf16.msra.mxu0 %v1769
        %2242 = vmatprep.subr.bf16.mxu0 %v1774
        %2243 = vmatpush1.bf16.msra.mxu0 %v1773
        %2244 = vmatprep.subr.bf16.mxu0 %v1778
        %2245 = vmatpush1.bf16.msra.mxu0 %v1777
        %2246 = vmatprep.subr.bf16.mxu0 %v1782
        %2247 = vmatpush1.bf16.msra.mxu0 %v1781
        %2248 = vmatprep.subr.bf16.mxu0 %v1786
        %2249 = vmatpush1.bf16.msra.mxu0 %v1785
        %2250 = vmatprep.subr.bf16.mxu0 %v1790
        %2251 = vmatpush1.bf16.msra.mxu0 %v1789
        %2252 = vmatprep.subr.bf16.mxu0 %v1794
        %2253 = vmatpush1.bf16.msra.mxu0 %v1793
        %2254 = vmatprep.mubr.bf16.mxu0 %v640
        %2255 = vmatmul.mubr.bf16.gmra.mrb[0].mxu0 %v639
        %v2256 = vpop.f32.mrb[0].mxu0
        %v2257 = vadd.f32 %v2216, %v2256
        %v2258 = vpop.f32.mrb[0].mxu0
        %v2259 = vadd.f32 %v2218, %v2258
        %v2260 = vpop.f32.mrb[0].mxu0
        %v2261 = vpop.f32.mrb[0].mxu0
        %2262 = vdwg.mxu0
        %2263 = vmatprep.subr.bf16.mxu0 %v1798
        %2264 = vmatpush1.bf16.msra.mxu0 %v1797
        %2265 = vmatprep.subr.bf16.mxu0 %v1802
        %2266 = vmatpush1.bf16.msra.mxu0 %v1801
        %2267 = vmatprep.subr.bf16.mxu0 %v1806
        %2268 = vmatpush1.bf16.msra.mxu0 %v1805
        %2269 = vmatprep.subr.bf16.mxu0 %v1810
        %2270 = vmatpush1.bf16.msra.mxu0 %v1809
        %2271 = vmatprep.subr.bf16.mxu0 %v1814
        %2272 = vmatpush1.bf16.msra.mxu0 %v1813
        %2273 = vmatprep.subr.bf16.mxu0 %v1818
        %2274 = vmatpush1.bf16.msra.mxu0 %v1817
        %2275 = vmatprep.subr.bf16.mxu0 %v1822
        %2276 = vmatpush1.bf16.msra.mxu0 %v1821
        %2277 = vmatprep.subr.bf16.mxu0 %v1826
        %2278 = vmatpush1.bf16.msra.mxu0 %v1825
        %2279 = vmatprep.subr.bf16.mxu0 %v1830
        %2280 = vmatpush1.bf16.msra.mxu0 %v1829
        %2281 = vmatprep.subr.bf16.mxu0 %v1834
        %2282 = vmatpush1.bf16.msra.mxu0 %v1833
        %2283 = vmatprep.subr.bf16.mxu0 %v1838
        %2284 = vmatpush1.bf16.msra.mxu0 %v1837
        %2285 = vmatprep.subr.bf16.mxu0 %v1842
        %2286 = vmatpush1.bf16.msra.mxu0 %v1841
        %2287 = vmatprep.subr.bf16.mxu0 %v1846
        %2288 = vmatpush1.bf16.msra.mxu0 %v1845
        %2289 = vmatprep.subr.bf16.mxu0 %v1850
        %2290 = vmatpush1.bf16.msra.mxu0 %v1849
        %2291 = vmatprep.subr.bf16.mxu0 %v1854
        %2292 = vmatpush1.bf16.msra.mxu0 %v1853
        %2293 = vmatprep.subr.bf16.mxu0 %v1858
        %2294 = vmatpush1.bf16.msra.mxu0 %v1857
        %2295 = vmatprep.mubr.bf16.mxu0 %v642
        %2296 = vmatmul.mubr.bf16.gmra.mrb[0].mxu0 %v641
        %v2297 = vpop.f32.mrb[0].mxu0
        %v2298 = vadd.f32 %v2257, %v2297
        %v2299 = vpop.f32.mrb[0].mxu0
        %v2300 = vadd.f32 %v2259, %v2299
        %v2301 = vpop.f32.mrb[0].mxu0
        %v2302 = vpop.f32.mrb[0].mxu0
        %2303 = vdwg.mxu0
        %2304 = vmatprep.subr.bf16.mxu0 %v1862
        %2305 = vmatpush1.bf16.msra.mxu0 %v1861
        %2306 = vmatprep.subr.bf16.mxu0 %v1866
        %2307 = vmatpush1.bf16.msra.mxu0 %v1865
        %2308 = vmatprep.subr.bf16.mxu0 %v1870
        %2309 = vmatpush1.bf16.msra.mxu0 %v1869
        %2310 = vmatprep.subr.bf16.mxu0 %v1874
        %2311 = vmatpush1.bf16.msra.mxu0 %v1873
        %2312 = vmatprep.subr.bf16.mxu0 %v1878
        %2313 = vmatpush1.bf16.msra.mxu0 %v1877
        %2314 = vmatprep.subr.bf16.mxu0 %v1882
        %2315 = vmatpush1.bf16.msra.mxu0 %v1881
        %2316 = vmatprep.subr.bf16.mxu0 %v1886
        %2317 = vmatpush1.bf16.msra.mxu0 %v1885
        %2318 = vmatprep.subr.bf16.mxu0 %v1890
        %2319 = vmatpush1.bf16.msra.mxu0 %v1889
        %2320 = vmatprep.subr.bf16.mxu0 %v1894
        %2321 = vmatpush1.bf16.msra.mxu0 %v1893
        %2322 = vmatprep.subr.bf16.mxu0 %v1898
        %2323 = vmatpush1.bf16.msra.mxu0 %v1897
        %2324 = vmatprep.subr.bf16.mxu0 %v1902
        %2325 = vmatpush1.bf16.msra.mxu0 %v1901
        %2326 = vmatprep.subr.bf16.mxu0 %v1906
        %2327 = vmatpush1.bf16.msra.mxu0 %v1905
        %2328 = vmatprep.subr.bf16.mxu0 %v1910
        %2329 = vmatpush1.bf16.msra.mxu0 %v1909
        %2330 = vmatprep.subr.bf16.mxu0 %v1914
        %2331 = vmatpush1.bf16.msra.mxu0 %v1913
        %2332 = vmatprep.subr.bf16.mxu0 %v1918
        %2333 = vmatpush1.bf16.msra.mxu0 %v1917
        %2334 = vmatprep.subr.bf16.mxu0 %v1922
        %2335 = vmatpush1.bf16.msra.mxu0 %v1921
        %2336 = vmatprep.mubr.bf16.mxu0 %v644
        %2337 = vmatmul.mubr.bf16.gmra.mrb[0].mxu0 %v643
        %v2338 = vpop.f32.mrb[0].mxu0
        %v2339 = vadd.f32 %v2298, %v2338
        %v2340 = vpop.f32.mrb[0].mxu0
        %v2341 = vadd.f32 %v2300, %v2340
        %v2342 = vpop.f32.mrb[0].mxu0
        %v2343 = vpop.f32.mrb[0].mxu0
        %2344 = vdwg.mxu0
        %2345 = vmatprep.subr.bf16.mxu0 %v1672
        %2346 = vmatpush1.bf16.msra.mxu0 %v1671
        %2347 = vmatprep.subr.bf16.mxu0 %v1676
        %2348 = vmatpush1.bf16.msra.mxu0 %v1675
        %2349 = vmatprep.subr.bf16.mxu0 %v1680
        %2350 = vmatpush1.bf16.msra.mxu0 %v1679
        %2351 = vmatprep.subr.bf16.mxu0 %v1684
        %2352 = vmatpush1.bf16.msra.mxu0 %v1683
        %2353 = vmatprep.subr.bf16.mxu0 %v1688
        %2354 = vmatpush1.bf16.msra.mxu0 %v1687
        %2355 = vmatprep.subr.bf16.mxu0 %v1692
        %2356 = vmatpush1.bf16.msra.mxu0 %v1691
        %2357 = vmatprep.subr.bf16.mxu0 %v1696
        %2358 = vmatpush1.bf16.msra.mxu0 %v1695
        %2359 = vmatprep.subr.bf16.mxu0 %v1700
        %2360 = vmatpush1.bf16.msra.mxu0 %v1699
        %2361 = vmatprep.subr.bf16.mxu0 %v1704
        %2362 = vmatpush1.bf16.msra.mxu0 %v1703
        %2363 = vmatprep.subr.bf16.mxu0 %v1708
        %2364 = vmatpush1.bf16.msra.mxu0 %v1707
        %2365 = vmatprep.subr.bf16.mxu0 %v1712
        %2366 = vmatpush1.bf16.msra.mxu0 %v1711
        %2367 = vmatprep.subr.bf16.mxu0 %v1716
        %2368 = vmatpush1.bf16.msra.mxu0 %v1715
        %2369 = vmatprep.subr.bf16.mxu0 %v1720
        %2370 = vmatpush1.bf16.msra.mxu0 %v1719
        %2371 = vmatprep.subr.bf16.mxu0 %v1724
        %2372 = vmatpush1.bf16.msra.mxu0 %v1723
        %2373 = vmatprep.subr.bf16.mxu0 %v1728
        %2374 = vmatpush1.bf16.msra.mxu0 %v1727
        %2375 = vmatprep.subr.bf16.mxu0 %v1732
        %2376 = vmatpush1.bf16.msra.mxu0 %v1731
        %2377 = vmatprep.mubr.bf16.mxu0 %v638
        %2378 = vmatmul.mubr.bf16.gmra.mrb[0].mxu0 %v637
        %v2379 = vpop.f32.mrb[0].mxu0
        %v2380 = vadd.f32 0.0, %v2379
        %v2381 = vpop.f32.mrb[0].mxu0
        %v2382 = vadd.f32 0.0, %v2381
        %v2383 = vpop.f32.mrb[0].mxu0
        %v2384 = vpop.f32.mrb[0].mxu0
        %2385 = vdwg.mxu0
        %2386 = vmatprep.subr.bf16.mxu0 %v1736
        %2387 = vmatpush1.bf16.msra.mxu0 %v1735
        %2388 = vmatprep.subr.bf16.mxu0 %v1740
        %2389 = vmatpush1.bf16.msra.mxu0 %v1739
        %2390 = vmatprep.subr.bf16.mxu0 %v1744
        %2391 = vmatpush1.bf16.msra.mxu0 %v1743
        %2392 = vmatprep.subr.bf16.mxu0 %v1748
        %2393 = vmatpush1.bf16.msra.mxu0 %v1747
        %2394 = vmatprep.subr.bf16.mxu0 %v1752
        %2395 = vmatpush1.bf16.msra.mxu0 %v1751
        %2396 = vmatprep.subr.bf16.mxu0 %v1756
        %2397 = vmatpush1.bf16.msra.mxu0 %v1755
        %2398 = vmatprep.subr.bf16.mxu0 %v1760
        %2399 = vmatpush1.bf16.msra.mxu0 %v1759
        %2400 = vmatprep.subr.bf16.mxu0 %v1764
        %2401 = vmatpush1.bf16.msra.mxu0 %v1763
        %2402 = vmatprep.subr.bf16.mxu0 %v1768
        %2403 = vmatpush1.bf16.msra.mxu0 %v1767
        %2404 = vmatprep.subr.bf16.mxu0 %v1772
        %2405 = vmatpush1.bf16.msra.mxu0 %v1771
        %2406 = vmatprep.subr.bf16.mxu0 %v1776
        %2407 = vmatpush1.bf16.msra.mxu0 %v1775
        %2408 = vmatprep.subr.bf16.mxu0 %v1780
        %2409 = vmatpush1.bf16.msra.mxu0 %v1779
        %2410 = vmatprep.subr.bf16.mxu0 %v1784
        %2411 = vmatpush1.bf16.msra.mxu0 %v1783
        %2412 = vmatprep.subr.bf16.mxu0 %v1788
        %2413 = vmatpush1.bf16.msra.mxu0 %v1787
        %2414 = vmatprep.subr.bf16.mxu0 %v1792
        %2415 = vmatpush1.bf16.msra.mxu0 %v1791
        %2416 = vmatprep.subr.bf16.mxu0 %v1796
        %2417 = vmatpush1.bf16.msra.mxu0 %v1795
        %2418 = vmatprep.mubr.bf16.mxu0 %v640
        %2419 = vmatmul.mubr.bf16.gmra.mrb[0].mxu0 %v639
        %v2420 = vpop.f32.mrb[0].mxu0
        %v2421 = vadd.f32 %v2380, %v2420
        %v2422 = vpop.f32.mrb[0].mxu0
        %v2423 = vadd.f32 %v2382, %v2422
        %v2424 = vpop.f32.mrb[0].mxu0
        %v2425 = vpop.f32.mrb[0].mxu0
        %2426 = vdwg.mxu0
        %2427 = vmatprep.subr.bf16.mxu0 %v1800
        %2428 = vmatpush1.bf16.msra.mxu0 %v1799
        %2429 = vmatprep.subr.bf16.mxu0 %v1804
        %2430 = vmatpush1.bf16.msra.mxu0 %v1803
        %2431 = vmatprep.subr.bf16.mxu0 %v1808
        %2432 = vmatpush1.bf16.msra.mxu0 %v1807
        %2433 = vmatprep.subr.bf16.mxu0 %v1812
        %2434 = vmatpush1.bf16.msra.mxu0 %v1811
        %2435 = vmatprep.subr.bf16.mxu0 %v1816
        %2436 = vmatpush1.bf16.msra.mxu0 %v1815
        %2437 = vmatprep.subr.bf16.mxu0 %v1820
        %2438 = vmatpush1.bf16.msra.mxu0 %v1819
        %2439 = vmatprep.subr.bf16.mxu0 %v1824
        %2440 = vmatpush1.bf16.msra.mxu0 %v1823
        %2441 = vmatprep.subr.bf16.mxu0 %v1828
        %2442 = vmatpush1.bf16.msra.mxu0 %v1827
        %2443 = vmatprep.subr.bf16.mxu0 %v1832
        %2444 = vmatpush1.bf16.msra.mxu0 %v1831
        %2445 = vmatprep.subr.bf16.mxu0 %v1836
        %2446 = vmatpush1.bf16.msra.mxu0 %v1835
        %2447 = vmatprep.subr.bf16.mxu0 %v1840
        %2448 = vmatpush1.bf16.msra.mxu0 %v1839
        %2449 = vmatprep.subr.bf16.mxu0 %v1844
        %2450 = vmatpush1.bf16.msra.mxu0 %v1843
        %2451 = vmatprep.subr.bf16.mxu0 %v1848
        %2452 = vmatpush1.bf16.msra.mxu0 %v1847
        %2453 = vmatprep.subr.bf16.mxu0 %v1852
        %2454 = vmatpush1.bf16.msra.mxu0 %v1851
        %2455 = vmatprep.subr.bf16.mxu0 %v1856
        %2456 = vmatpush1.bf16.msra.mxu0 %v1855
        %2457 = vmatprep.subr.bf16.mxu0 %v1860
        %2458 = vmatpush1.bf16.msra.mxu0 %v1859
        %2459 = vmatprep.mubr.bf16.mxu0 %v642
        %2460 = vmatmul.mubr.bf16.gmra.mrb[0].mxu0 %v641
        %v2461 = vpop.f32.mrb[0].mxu0
        %v2462 = vadd.f32 %v2421, %v2461
        %v2463 = vpop.f32.mrb[0].mxu0
        %v2464 = vadd.f32 %v2423, %v2463
        %v2465 = vpop.f32.mrb[0].mxu0
        %v2466 = vpop.f32.mrb[0].mxu0
        %2467 = vdwg.mxu0
        %2468 = vmatprep.subr.bf16.mxu0 %v1864
        %2469 = vmatpush1.bf16.msra.mxu0 %v1863
        %2470 = vmatprep.subr.bf16.mxu0 %v1868
        %2471 = vmatpush1.bf16.msra.mxu0 %v1867
        %2472 = vmatprep.subr.bf16.mxu0 %v1872
        %2473 = vmatpush1.bf16.msra.mxu0 %v1871
        %2474 = vmatprep.subr.bf16.mxu0 %v1876
        %2475 = vmatpush1.bf16.msra.mxu0 %v1875
        %2476 = vmatprep.subr.bf16.mxu0 %v1880
        %2477 = vmatpush1.bf16.msra.mxu0 %v1879
        %2478 = vmatprep.subr.bf16.mxu0 %v1884
        %2479 = vmatpush1.bf16.msra.mxu0 %v1883
        %2480 = vmatprep.subr.bf16.mxu0 %v1888
        %2481 = vmatpush1.bf16.msra.mxu0 %v1887
        %2482 = vmatprep.subr.bf16.mxu0 %v1892
        %2483 = vmatpush1.bf16.msra.mxu0 %v1891
        %2484 = vmatprep.subr.bf16.mxu0 %v1896
        %2485 = vmatpush1.bf16.msra.mxu0 %v1895
        %2486 = vmatprep.subr.bf16.mxu0 %v1900
        %2487 = vmatpush1.bf16.msra.mxu0 %v1899
        %2488 = vmatprep.subr.bf16.mxu0 %v1904
        %2489 = vmatpush1.bf16.msra.mxu0 %v1903
        %2490 = vmatprep.subr.bf16.mxu0 %v1908
        %2491 = vmatpush1.bf16.msra.mxu0 %v1907
        %2492 = vmatprep.subr.bf16.mxu0 %v1912
        %2493 = vmatpush1.bf16.msra.mxu0 %v1911
        %2494 = vmatprep.subr.bf16.mxu0 %v1916
        %2495 = vmatpush1.bf16.msra.mxu0 %v1915
        %2496 = vmatprep.subr.bf16.mxu0 %v1920
        %2497 = vmatpush1.bf16.msra.mxu0 %v1919
        %2498 = vmatprep.subr.bf16.mxu0 %v1924
        %2499 = vmatpush1.bf16.msra.mxu0 %v1923
        %2500 = vmatprep.mubr.bf16.mxu0 %v644
        %2501 = vmatmul.mubr.bf16.gmra.mrb[0].mxu0 %v643
        %v2502 = vpop.f32.mrb[0].mxu0
        %v2503 = vadd.f32 %v2462, %v2502
        %v2504 = vpop.f32.mrb[0].mxu0
        %v2505 = vadd.f32 %v2464, %v2504
        %v2506 = vpop.f32.mrb[0].mxu0
        %v2507 = vpop.f32.mrb[0].mxu0
        %2508 = vdwg.mxu0
        %v2509 = vxor.u32 %v2339, 2147483648
        %v2510 = vxor.u32 %v2341, 2147483648
        %v2511 = vxor.u32 %v2503, 2147483648
        %v2512 = vxor.u32 %v2505, 2147483648
        %v2513 = vmul.f32 %v2509, 1.442695
        %v2514 = vpow.pop %v2513
        %v2515 = vmul.f32 %v2510, 1.442695
        %v2516 = vpow.pop %v2515
        %v2517 = vmul.f32 %v2511, 1.442695
        %v2518 = vpow.pop %v2517
        %v2519 = vmul.f32 %v2512, 1.442695
        %v2520 = vpow.pop %v2519
        %v2521 = vadd.f32 %v2514, 1.0
        %v2522 = vadd.f32 %v2516, 1.0
        %v2523 = vadd.f32 %v2518, 1.0
        %v2524 = vadd.f32 %v2520, 1.0
        %v2525 = vrcp.pop %v2521
        %v2526 = vmul.f32 1.0, %v2525
        %v2527 = vrcp.pop %v2522
        %v2528 = vmul.f32 1.0, %v2527
        %v2529 = vrcp.pop %v2523
        %v2530 = vmul.f32 1.0, %v2529
        %v2531 = vrcp.pop %v2524
        %v2532 = vmul.f32 1.0, %v2531
        %v2533 = vlaneseq
        %v2534 = vshrl.u32 %v2533, 7
        %v2535 = vsub.s32 0, %v2534
        %v2536 = vrot.slane %v2526, %v2535
        %v2537 = vlaneseq
        %v2538 = vshrl.u32 %v2537, 7
        %v2539 = vsub.s32 0, %v2538
        %v2540 = vrot.slane %v2528, %v2539
        %v2541 = vmul.f32 %v564, %v2536
        %v2542 = vmul.f32 %v565, %v2540
        %v2543 = vadd.f32 %v2541, %v294
        %v2544 = vadd.f32 %v2542, %v296
        %v2545 = vlaneseq
        %v2546 = vshrl.u32 %v2545, 7
        %v2547 = vsub.s32 0, %v2546
        %v2548 = vrot.slane %v2530, %v2547
        %v2549 = vlaneseq
        %v2550 = vshrl.u32 %v2549, 7
        %v2551 = vsub.s32 0, %v2550
        %v2552 = vrot.slane %v2532, %v2551
        %v2553 = vmul.f32 %v571, %v2548
        %v2554 = vmul.f32 %v572, %v2552
        %v2555 = vadd.f32 %v2553, %v298
        %v2556 = vadd.f32 %v2554, %v300
        %v2557 = vmul.f32 %v2543, %v2555
        %v2558 = vmul.f32 %v2544, %v2556
        %v2559 = vadd.f32 %v2543, %v2555
        %v2560 = vadd.f32 %v2544, %v2556
        %v2561 = vpack.c.bf16 %v227, %v227
        %v2562 = vpack.c.bf16 %v2559, %v2557
        %v2563 = vpack.c.bf16 %v2560, %v2558
        %2565 = vset.pattern.permute.xlu0 0
        %2566 = vperm.xlu0 %2565, %v236
        %v2567 = vpop.permute.xlu0 %2566
        %vm2569 = vcmask 162816
        %v2571 = vsel %vm2569, %v2561, 0
        %2573 = vmatprep.subr.bf16.mxu0 %v2563
        %2574 = vmatpush1.bf16.msra.mxu0 %v2562
        %2575 = vmatprep.subr.bf16.mxu0 %v257
        %2576 = vmatpush1.bf16.msra.mxu0 %v254
        %2577 = vmatprep.subr.bf16.mxu0 0
        %2578 = vmatpush1.bf16.msra.mxu0 0
        %2579 = vmatprep.subr.bf16.mxu0 0
        %2580 = vmatpush1.bf16.msra.mxu0 0
        %2581 = vmatprep.subr.bf16.mxu0 0
        %2582 = vmatpush1.bf16.msra.mxu0 0
        %2583 = vmatprep.subr.bf16.mxu0 0
        %2584 = vmatpush1.bf16.msra.mxu0 0
        %2585 = vmatprep.subr.bf16.mxu0 0
        %2586 = vmatpush1.bf16.msra.mxu0 0
        %2587 = vmatprep.subr.bf16.mxu0 0
        %2588 = vmatpush1.bf16.msra.mxu0 0
        %2589 = vmatprep.subr.bf16.mxu0 0
        %2590 = vmatpush1.bf16.msra.mxu0 0
        %2591 = vmatprep.subr.bf16.mxu0 0
        %2592 = vmatpush1.bf16.msra.mxu0 0
        %2593 = vmatprep.subr.bf16.mxu0 0
        %2594 = vmatpush1.bf16.msra.mxu0 0
        %2595 = vmatprep.subr.bf16.mxu0 0
        %2596 = vmatpush1.bf16.msra.mxu0 0
        %2597 = vmatprep.subr.bf16.mxu0 0
        %2598 = vmatpush1.bf16.msra.mxu0 0
        %2599 = vmatprep.subr.bf16.mxu0 0
        %2600 = vmatpush1.bf16.msra.mxu0 0
        %2601 = vmatprep.subr.bf16.mxu0 0
        %2602 = vmatpush1.bf16.msra.mxu0 0
        %2603 = vmatprep.subr.bf16.mxu0 0
        %2604 = vmatpush1.bf16.msra.mxu0 0
        %2605 = vmatprep.mubr.bf16.mxu0 0
        %2606 = vmatmul.mubr.bf16.gmra.mrb[0].mxu0 %v2571
        %v2607 = vpop.f32.mrb[0].mxu0
        %v2608 = vadd.f32 %v2567, %v2607
        %v2609 = vpop.f32.mrb[0].mxu0
        %v2610 = vadd.f32 %v2567, %v2609
        %v2611 = vpop.f32.mrb[0].mxu0
        %v2612 = vpop.f32.mrb[0].mxu0
        %2613 = vdwg.mxu0
        %2614 = vst [vmem:[%s215] sm:$0x3f] %v2608
        %2615 = vst [vmem:[%s215 + $0x8] sm:$0x3f] %v2610
        %s2616 = sand.u32 %s97, 1
        %s2617 = scalar_lea.sflag [#allocation4], %s2616
        %s2618 = sand.u32 %s97, 1
        %s2619 = smul.addr %s2618, 16
        %s2620 = scalar_lea.vmem [#allocation8], %s2619
        // Predicated region
        $region45: #{tpu_custom_call.1} parent=31 // pred_check
          %p2621 = pneg %p107
        $region46: #{tpu_custom_call.1} parent=31 // pred_check_branch
          %2623 = sbr.rel (%p2621) target = $region48
        $region47: #{tpu_custom_call.1} parent=31 // pred_region
          %s2624 = smul.u32 2, %s21
          %s2626 = ssub.s32 256, 256
          %2627 = vsyncadd %s2617, %s2626
          %s2628 = smul.addr %s2624, 128
          %s2629 = scalar_lea.hbm %s3, %s2628
          %s2631 = sshll.u32 %s2620, 4
          %s2632 = int_to_ptr.vmem [resolvable:$true] %s2631
          %2634 = dma.vmem_to_hbm [thread:$0]  %s2632, 256, %s2629, %s2617
        $region48: #{tpu_custom_call.1} parent=31 // pred_fallthru
          _
      $region32: #{tpu_custom_call.1} parent=5 // pred_fallthru
        _
      %p2635 = scmp.le.s32.totalorder 2, %s16
      // Predicated region
      $region49: #{tpu_custom_call.1} parent=5 // pred_check
        %p2636 = pneg %p2635
      $region50: #{tpu_custom_call.1} parent=5 // pred_check_branch
        %2638 = sbr.rel (%p2636) target = $region52
      $region51: #{tpu_custom_call.1} parent=5 // pred_region
        %s2639 = ssub.s32 %s16, 2
        // Predicated region
        $region53: #{tpu_custom_call.1} parent=51 // pred_check
          %p2640 = pneg %p113
        $region54: #{tpu_custom_call.1} parent=51 // pred_check_branch
          %2642 = sbr.rel (%p2640) target = $region56
        $region55: #{tpu_custom_call.1} parent=51 // pred_region
          %s2643 = sand.u32 %s98, 1
          %s2644 = scalar_lea.sflag [#allocation4], %s2643
          %s2645 = sand.u32 %s98, 1
          %s2646 = smul.addr %s2645, 16
          %s2647 = scalar_lea.vmem [#allocation8], %s2646
          %2648 = dma.done %s2644, 256
        $region56: #{tpu_custom_call.1} parent=51 // pred_fallthru
          _
      $region52: #{tpu_custom_call.1} parent=5 // pred_fallthru
        _
    $region6: #{tpu_custom_call.1} parent=1 // loop_footer
      %s20 = sadd.s32 1, %s16
    $region7: #{tpu_custom_call.1} parent=1 // loop_footer_branch
      %15 = sbr.rel target = $region3
    $region8: #{tpu_custom_call.1} parent=1 // loop_exit
      _
    %2649 = vsyncpa [#allocation3], 1
    %s2650 = scalar_lea.sflag [#allocation3], 1
    %2651 = vsyncpa %s2650, 1
    %2652 = vsyncpa [#allocation6], 1
    %2653 = vsyncpa [#allocation4], 1
    %s2654 = scalar_lea.sflag [#allocation4], 1
    %2655 = vsyncpa %s2654, 1

</llo_original>
